<compile_context>
chip_gen: v6e
topology: v6e:2x2x1
jax: 0.10.0
libtpu: 0.0.40
codegen_flags: <defaults>
</compile_context>

<pallas_src>
import functools

import jax
import jax.numpy as jnp
from jax.experimental import pallas as pl
from jax.experimental.pallas import tpu as pltpu

FLAT = 28 * 28       # 784  (nn.Flatten of (1, 28, 28)); multiple of 8 sublanes
HIDDEN = 800
HIDDEN_P = 896       # 7 * 128  (padded hidden dim)
OUT_P = 128          # padded output lane dim (>= dim_y)
NEG_BIG = -1e30      # finite "minus infinity" for padded logit columns


def _cdiv(a, b):
    return -(-a // b)


def _round_up(x, m):
    return _cdiv(x, m) * m


def _mlp_softmax_kernel(x_ref, w1_ref, b1_ref, w2_ref, b2_ref, o_ref):
    # x:  (TB, 784) f32       w1: (784, 896) bf16   b1: (1, 896) f32
    # w2: (896, 128) bf16     b2: (1, 128)  f32     o:  (TB, 128) f32
    x = x_ref[...].astype(jnp.bfloat16)   # cast in-kernel (VPU) — no wrapper HBM pass

    # Linear 1 + ReLU (MXU, f32 accumulate)
    h = jnp.dot(x, w1_ref[...], preferred_element_type=jnp.float32) + b1_ref[...]
    h = jnp.maximum(h, 0.0)

    # Linear 2 (bf16 operands, f32 accumulate). Padded columns of w2 are zero
    # and padded entries of b2 are -1e30 -> those logits softmax to 0.
    logits = jnp.dot(h.astype(jnp.bfloat16), w2_ref[...],
                     preferred_element_type=jnp.float32) + b2_ref[...]

    # Numerically stable softmax over the (lane-dense, 128-wide) last dim.
    m = jnp.max(logits, axis=-1, keepdims=True)
    e = jnp.exp(logits - m)
    denom = jnp.sum(e, axis=-1, keepdims=True)
    o_ref[...] = (e * pl.reciprocal(denom, approx=True)).astype(o_ref.dtype)


@functools.partial(jax.jit, static_argnames=("tb",))
def classifier_small_forward(x_nchw, w1, b1, w2, b2, *, tb=1024):
    """x_nchw: (B, 1, 28, 28) float32. Returns softmax probs (B, dim_y) f32."""
    B = x_nchw.shape[0]
    dim_y = w2.shape[1]
    assert 1 <= dim_y <= OUT_P

    # nn.Flatten is row-major over (C, H, W) == reshape(B, -1); reshape is free.
    x_flat = x_nchw.reshape(B, -1).astype(jnp.float32)
    assert x_flat.shape[1] == FLAT

    # ---- pad weight feature dims to lane multiples (tiny, one-off) ----------
    w1_p = jnp.pad(w1, ((0, 0), (0, HIDDEN_P - HIDDEN))).astype(jnp.bfloat16)
    b1_p = jnp.pad(b1.reshape(1, -1).astype(jnp.float32),
                   ((0, 0), (0, HIDDEN_P - HIDDEN)))
    w2_p = jnp.pad(w2, ((0, HIDDEN_P - HIDDEN), (0, OUT_P - dim_y))).astype(jnp.bfloat16)
    b2_p = jnp.pad(b2.reshape(1, -1).astype(jnp.float32),
                   ((0, 0), (0, OUT_P - dim_y)), constant_values=NEG_BIG)

    # ---- adaptive batch tiling ----------------------------------------------
    # Target ~tb rows/step, but (a) keep row-padding waste small, (b) give the
    # grid >= 2 (even) steps when B >= 16 so both v7x TensorCores get work.
    n_steps = max(1, _cdiv(B, tb))
    if n_steps == 1 and B >= 16:
        n_steps = 2
    if n_steps >= 2 and n_steps % 2 == 1:
        n_steps += 1
    TB = _round_up(_cdiv(B, n_steps), 8)           # sublane multiple
    Bp = _round_up(B, TB)
    if Bp != B:
        x_flat = jnp.pad(x_flat, ((0, Bp - B), (0, 0)))
    grid = (Bp // TB,)

    cost = pl.CostEstimate(
        flops=2 * Bp * (FLAT * HIDDEN_P + HIDDEN_P * OUT_P),
        transcendentals=Bp * OUT_P,
        bytes_accessed=(x_flat.size * 4 + w1_p.size * 2 + w2_p.size * 2
                        + b1_p.size * 4 + b2_p.size * 4 + Bp * OUT_P * 4),
    )

    out = pl.pallas_call(
        _mlp_softmax_kernel,
        out_shape=jax.ShapeDtypeStruct((Bp, OUT_P), jnp.float32),
        grid=grid,
        in_specs=[
            # x tile: last dim 784 == full array dim (legal), pipelined per step
            pl.BlockSpec((TB, FLAT), lambda i: (i, 0)),
            pl.BlockSpec((FLAT, HIDDEN_P), lambda i: (0, 0)),    # w1 (VMEM-resident)
            pl.BlockSpec((1, HIDDEN_P), lambda i: (0, 0)),       # b1 (resident)
            pl.BlockSpec((HIDDEN_P, OUT_P), lambda i: (0, 0)),   # w2 (resident)
            pl.BlockSpec((1, OUT_P), lambda i: (0, 0)),          # b2 (resident)
        ],
        out_specs=pl.BlockSpec((TB, OUT_P), lambda i: (i, 0)),   # lane-dense store
        compiler_params=pltpu.CompilerParams(
            dimension_semantics=("parallel",),          # megacore split on v7x
            vmem_limit_bytes=48 * 1024 * 1024,          # > v5e's 16 MiB default
        ),
        cost_estimate=cost,
    )(x_flat, w1_p, b1_p, w2_p, b2_p)

    return out[:B, :dim_y]


def init_params(key, dim_y):
    """Deterministic synthetic init (uniform, PyTorch-Linear-like fan_in bound)."""
    k1, k2, k3, k4 = jax.random.split(key, 4)
    bound1 = 1.0 / jnp.sqrt(FLAT)
    bound2 = 1.0 / jnp.sqrt(HIDDEN)
    w1 = jax.random.uniform(k1, (FLAT, HIDDEN), jnp.float32, -bound1, bound1)
    b1 = jax.random.uniform(k2, (HIDDEN,), jnp.float32, -bound1, bound1)
    w2 = jax.random.uniform(k3, (HIDDEN, dim_y), jnp.float32, -bound2, bound2)
    b2 = jax.random.uniform(k4, (dim_y,), jnp.float32, -bound2, bound2)
    return w1, b1, w2, b2


def _reference(x_nchw, w1, b1, w2, b2):
    x = x_nchw.reshape(x_nchw.shape[0], -1)
    h = jnp.maximum(x @ w1 + b1, 0.0)
    return jax.nn.softmax(h @ w2 + b2, axis=-1)


if __name__ == "__main__":
    key = jax.random.PRNGKey(0)
    k_in, k_par = jax.random.split(key)

    B, dim_y = 8, 10
    x = jax.random.normal(k_in, (B, 1, 28, 28), jnp.float32)   # NCHW like PyTorch
    w1, b1, w2, b2 = init_params(k_par, dim_y)

    probs = classifier_small_forward(x, w1, b1, w2, b2)
    probs = jax.block_until_ready(probs)

    # sanity: shape, softmax rows sum to 1, and matches the f32 reference
    assert probs.shape == (B, dim_y)
    row_sums = jnp.sum(probs, axis=-1)
    assert jnp.allclose(row_sums, jnp.ones_like(row_sums), atol=2e-2)
    ref = _reference(x, w1, b1, w2, b2)
    assert jnp.allclose(probs, ref, atol=3e-2)   # bf16 matmul / approx-recip tolerance

    print("KERNEL_OK")
</pallas_src>

<mosaic_0001>
module attributes {stable_mosaic.version = 11 : i64} {
  func.func @_mlp_softmax_kernel(%arg0: i32, %arg1: memref<8x784xf32, #tpu.memory_space<vmem>>, %arg2: memref<784x896xbf16, #tpu.memory_space<vmem>>, %arg3: memref<1x896xf32, #tpu.memory_space<vmem>>, %arg4: memref<896x128xbf16, #tpu.memory_space<vmem>>, %arg5: memref<1x128xf32, #tpu.memory_space<vmem>>, %arg6: memref<8x128xf32, #tpu.memory_space<vmem>>) attributes {dimension_semantics = [#tpu.dimension_semantics<parallel>], iteration_bounds = array<i64: 1>, scalar_prefetch = 0 : i64, scratch_operands = 0 : i64, tpu.core_type = #tpu.core_type<tc>, window_params = [{transform_indices = @transform_0, window_bounds = array<i64: 8, 784>}, {pipeline_mode = #tpu.pipeline_mode<synchronous>, transform_indices = @transform_1, window_bounds = array<i64: 784, 896>}, {pipeline_mode = #tpu.pipeline_mode<synchronous>, transform_indices = @transform_2, window_bounds = array<i64: 1, 896>}, {pipeline_mode = #tpu.pipeline_mode<synchronous>, transform_indices = @transform_3, window_bounds = array<i64: 896, 128>}, {pipeline_mode = #tpu.pipeline_mode<synchronous>, transform_indices = @transform_4, window_bounds = array<i64: 1, 128>}, {transform_indices = @transform_5, window_bounds = array<i64: 8, 128>}]} {
    %c0 = arith.constant 0 : index
    %c0_0 = arith.constant 0 : index
    %0 = vector.load %arg1[%c0, %c0_0] : memref<8x784xf32, #tpu.memory_space<vmem>>, vector<8x784xf32>
    %1 = arith.truncf %0 : vector<8x784xf32> to vector<8x784xbf16>
    %c0_1 = arith.constant 0 : index
    %c0_2 = arith.constant 0 : index
    %2 = vector.load %arg2[%c0_1, %c0_2] : memref<784x896xbf16, #tpu.memory_space<vmem>>, vector<784x896xbf16>
    %cst = arith.constant dense<0.000000e+00> : vector<8x896xf32>
    %3 = tpu.matmul %1, %2, %cst {dimension_numbers = #tpu.dot_dimension_numbers<[1], [0], [0], [1], [0, 0, 1, 1], [], []>} : vector<8x784xbf16>, vector<784x896xbf16>, vector<8x896xf32> -> vector<8x896xf32>
    %c0_3 = arith.constant 0 : index
    %c0_4 = arith.constant 0 : index
    %4 = vector.load %arg3[%c0_3, %c0_4] : memref<1x896xf32, #tpu.memory_space<vmem>>, vector<1x896xf32>
    %5 = vector.broadcast %4 : vector<1x896xf32> to vector<8x896xf32>
    %6 = arith.addf %3, %5 : vector<8x896xf32>
    %cst_5 = arith.constant 0.000000e+00 : f32
    %7 = vector.broadcast %cst_5 : f32 to vector<8x896xf32>
    %8 = arith.maximumf %6, %7 : vector<8x896xf32>
    %9 = arith.truncf %8 : vector<8x896xf32> to vector<8x896xbf16>
    %c0_6 = arith.constant 0 : index
    %c0_7 = arith.constant 0 : index
    %10 = vector.load %arg4[%c0_6, %c0_7] : memref<896x128xbf16, #tpu.memory_space<vmem>>, vector<896x128xbf16>
    %cst_8 = arith.constant dense<0.000000e+00> : vector<8x128xf32>
    %11 = tpu.matmul %9, %10, %cst_8 {dimension_numbers = #tpu.dot_dimension_numbers<[1], [0], [0], [1], [0, 0, 1, 1], [], []>} : vector<8x896xbf16>, vector<896x128xbf16>, vector<8x128xf32> -> vector<8x128xf32>
    %c0_9 = arith.constant 0 : index
    %c0_10 = arith.constant 0 : index
    %12 = vector.load %arg5[%c0_9, %c0_10] : memref<1x128xf32, #tpu.memory_space<vmem>>, vector<1x128xf32>
    %13 = vector.broadcast %12 : vector<1x128xf32> to vector<8x128xf32>
    %14 = arith.addf %11, %13 : vector<8x128xf32>
    %cst_11 = arith.constant dense<0xFF800000> : vector<8xf32>
    %15 = vector.multi_reduction <maximumf>, %14, %cst_11 [1] : vector<8x128xf32> to vector<8xf32>
    %16 = vector.shape_cast %15 : vector<8xf32> to vector<8x1xf32>
    %17 = vector.broadcast %16 : vector<8x1xf32> to vector<8x128xf32>
    %18 = arith.subf %14, %17 : vector<8x128xf32>
    %19 = math.exp %18 : vector<8x128xf32>
    %cst_12 = arith.constant dense<0.000000e+00> : vector<8xf32>
    %20 = vector.multi_reduction <add>, %19, %cst_12 [1] : vector<8x128xf32> to vector<8xf32>
    %21 = vector.shape_cast %20 : vector<8xf32> to vector<8x1xf32>
    %22 = tpu.reciprocal %21 {approx = true} : vector<8x1xf32> -> vector<8x1xf32>
    %23 = vector.broadcast %22 : vector<8x1xf32> to vector<8x128xf32>
    %24 = arith.mulf %19, %23 : vector<8x128xf32>
    %c0_13 = arith.constant 0 : index
    %c0_14 = arith.constant 0 : index
    %25 = vector.load %arg6[%c0_13, %c0_14] : memref<8x128xf32, #tpu.memory_space<vmem>>, vector<8x128xf32>
    tpu.vector_store %arg6[%c0_13, %c0_14], %24 {strides = array<i32>} : memref<8x128xf32, #tpu.memory_space<vmem>>, vector<8x128xf32>,
    return
  }
  func.func @transform_0(%arg0: i32) -> (i32, i32) {
    %c0_i32 = arith.constant 0 : i32
    %c0_i32_0 = arith.constant 0 : i32
    return %arg0, %c0_i32 : i32, i32
  }
  func.func @transform_1(%arg0: i32) -> (i32, i32) {
    %c0_i32 = arith.constant 0 : i32
    %c0_i32_0 = arith.constant 0 : i32
    %c0_i32_1 = arith.constant 0 : i32
    return %c0_i32, %c0_i32_0 : i32, i32
  }
  func.func @transform_2(%arg0: i32) -> (i32, i32) {
    %c0_i32 = arith.constant 0 : i32
    %c0_i32_0 = arith.constant 0 : i32
    %c0_i32_1 = arith.constant 0 : i32
    return %c0_i32, %c0_i32_0 : i32, i32
  }
  func.func @transform_3(%arg0: i32) -> (i32, i32) {
    %c0_i32 = arith.constant 0 : i32
    %c0_i32_0 = arith.constant 0 : i32
    %c0_i32_1 = arith.constant 0 : i32
    return %c0_i32, %c0_i32_0 : i32, i32
  }
  func.func @transform_4(%arg0: i32) -> (i32, i32) {
    %c0_i32 = arith.constant 0 : i32
    %c0_i32_0 = arith.constant 0 : i32
    %c0_i32_1 = arith.constant 0 : i32
    return %c0_i32, %c0_i32_0 : i32, i32
  }
  func.func @transform_5(%arg0: i32) -> (i32, i32) {
    %c0_i32 = arith.constant 0 : i32
    %c0_i32_0 = arith.constant 0 : i32
    return %arg0, %c0_i32 : i32, i32
  }
}

</mosaic_0001>

<llo_original>
// kernel: classifier_small_forward.1
$region0: #{classifier_small_forward.1}
  #allocation0 [shape = 'u32[]', space=smem, size = 0x4, offset = 0x4, fixed_abs, tag = 'smem constant byte address 0x4 - core index']
  #allocation1 [shape = 'u32[144,128]{1,0:T(1,128)}', space=vmem, size = 0x12000, scoped, tag = 'internal scratch']
  %s0 = inlined_call_operand.vmem [shape: f32[8,784], index: 0, kind: input, shape index: {}]
  %s1 = inlined_call_operand.vmem [shape: bf16[784,896], index: 1, kind: input, shape index: {}]
  %s2 = inlined_call_operand.vmem [shape: f32[1,896], index: 2, kind: input, shape index: {}]
  %s3 = inlined_call_operand.vmem [shape: bf16[896,128], index: 3, kind: input, shape index: {}]
  %s4 = inlined_call_operand.vmem [shape: f32[1,128], index: 4, kind: input, shape index: {}]
  %s5 = inlined_call_operand.hbm [shape: f32[8,128], index: 5, kind: output, shape index: {}]
  %s6 = sld [smem:[#allocation0]]
  $region30: #{classifier_small_forward.1} parent=0
    _
  %s8 = ssub.s32 1, %s6
  %s9 = scalar_select 0, %s8, %s6
  $region1: #{classifier_small_forward.1} parent=0
    #allocation2 [shape = 'u8[4096]{0}', space=vmem, size = 0x1000, scoped, tag = 'output window, operand 0, single buffered']
    #allocation3 [shape = 's32[1]{0}', space=sflag, size = 0x4, scoped, tag = 'scoped memory for classifier_small_forward.1']
    %10 = vsyncpa [#allocation3], 0
    // Predicated region
    $region2: #{classifier_small_forward.1} parent=1 // pred_check
      _
    $region3: #{classifier_small_forward.1} parent=1 // pred_check_branch
      %12 = sbr.rel (0) target = $region5
    $region4: #{classifier_small_forward.1} parent=1 // pred_region
      _
    $region5: #{classifier_small_forward.1} parent=1 // pred_fallthru
      _
    // Predicated region
    $region6: #{classifier_small_forward.1} parent=1 // pred_check
      _
    $region7: #{classifier_small_forward.1} parent=1 // pred_check_branch
      %14 = sbr.rel (0) target = $region9
    $region8: #{classifier_small_forward.1} parent=1 // pred_region
      _
    $region9: #{classifier_small_forward.1} parent=1 // pred_fallthru
      _
    // Predicated region
    $region10: #{classifier_small_forward.1} parent=1 // pred_check
      _
    $region11: #{classifier_small_forward.1} parent=1 // pred_check_branch
      %16 = sbr.rel (0) target = $region13
    $region12: #{classifier_small_forward.1} parent=1 // pred_region
      _
    $region13: #{classifier_small_forward.1} parent=1 // pred_fallthru
      _
    // Predicated region
    $region14: #{classifier_small_forward.1} parent=1 // pred_check
      _
    $region15: #{classifier_small_forward.1} parent=1 // pred_check_branch
      %18 = sbr.rel (0) target = $region17
    $region16: #{classifier_small_forward.1} parent=1 // pred_region
      _
    $region17: #{classifier_small_forward.1} parent=1 // pred_fallthru
      _
    // Predicated region
    $region18: #{classifier_small_forward.1} parent=1 // pred_check
      _
    $region19: #{classifier_small_forward.1} parent=1 // pred_check_branch
      %20 = sbr.rel (0) target = $region21
    $region20: #{classifier_small_forward.1} parent=1 // pred_region
      _
    $region21: #{classifier_small_forward.1} parent=1 // pred_fallthru
      _
    %v22 = vld [vmem:[%s0] sm:$0xff]
    %v23 = vld [vmem:[%s0 + $0x8] sm:$0xff]
    %v24 = vld [vmem:[%s0 + $0x10] sm:$0xff]
    %v25 = vld [vmem:[%s0 + $0x18] sm:$0xff]
    %v26 = vld [vmem:[%s0 + $0x20] sm:$0xff]
    %v27 = vld [vmem:[%s0 + $0x28] sm:$0xff]
    %v28 = vld [vmem:[%s0 + $0x30] sm:$0xff]
    %v29 = vpack.c.bf16 %v22, %v22
    %v30 = vpack.c.bf16 %v23, %v23
    %v31 = vpack.c.bf16 %v24, %v24
    %v32 = vpack.c.bf16 %v25, %v25
    %v33 = vpack.c.bf16 %v26, %v26
    %v34 = vpack.c.bf16 %v27, %v27
    %v35 = vpack.c.bf16 %v28, %v28
    %v36 = vld [vmem:[%s1] sm:$0xff]
    %v37 = vld [vmem:[%s1 + $0x8] sm:$0xff]
    %v38 = vld [vmem:[%s1 + $0x10] sm:$0xff]
    %v39 = vld [vmem:[%s1 + $0x18] sm:$0xf]
    %v40 = vld [vmem:[%s1 + $0x1c] sm:$0xff]
    %v41 = vld [vmem:[%s1 + $0x24] sm:$0xff]
    %v42 = vld [vmem:[%s1 + $0x2c] sm:$0xff]
    %v43 = vld [vmem:[%s1 + $0x34] sm:$0xf]
    %v44 = vld [vmem:[%s1 + $0x38] sm:$0xff]
    %v45 = vld [vmem:[%s1 + $0x40] sm:$0xff]
    %v46 = vld [vmem:[%s1 + $0x48] sm:$0xff]
    %v47 = vld [vmem:[%s1 + $0x50] sm:$0xf]
    %v48 = vld [vmem:[%s1 + $0x54] sm:$0xff]
    %v49 = vld [vmem:[%s1 + $0x5c] sm:$0xff]
    %v50 = vld [vmem:[%s1 + $0x64] sm:$0xff]
    %v51 = vld [vmem:[%s1 + $0x6c] sm:$0xf]
    %v52 = vld [vmem:[%s1 + $0x70] sm:$0xff]
    %v53 = vld [vmem:[%s1 + $0x78] sm:$0xff]
    %v54 = vld [vmem:[%s1 + $0x80] sm:$0xff]
    %v55 = vld [vmem:[%s1 + $0x88] sm:$0xf]
    %v56 = vld [vmem:[%s1 + $0x8c] sm:$0xff]
    %v57 = vld [vmem:[%s1 + $0x94] sm:$0xff]
    %v58 = vld [vmem:[%s1 + $0x9c] sm:$0xff]
    %v59 = vld [vmem:[%s1 + $0xa4] sm:$0xf]
    %v60 = vld [vmem:[%s1 + $0xa8] sm:$0xff]
    %v61 = vld [vmem:[%s1 + $0xb0] sm:$0xff]
    %v62 = vld [vmem:[%s1 + $0xb8] sm:$0xff]
    %v63 = vld [vmem:[%s1 + $0xc0] sm:$0xf]
    %v64 = vld [vmem:[%s1 + $0xc4] sm:$0xff]
    %v65 = vld [vmem:[%s1 + $0xcc] sm:$0xff]
    %v66 = vld [vmem:[%s1 + $0xd4] sm:$0xff]
    %v67 = vld [vmem:[%s1 + $0xdc] sm:$0xf]
    %v68 = vld [vmem:[%s1 + $0xe0] sm:$0xff]
    %v69 = vld [vmem:[%s1 + $0xe8] sm:$0xff]
    %v70 = vld [vmem:[%s1 + $0xf0] sm:$0xff]
    %v71 = vld [vmem:[%s1 + $0xf8] sm:$0xf]
    %v72 = vld [vmem:[%s1 + $0xfc] sm:$0xff]
    %v73 = vld [vmem:[%s1 + $0x104] sm:$0xff]
    %v74 = vld [vmem:[%s1 + $0x10c] sm:$0xff]
    %v75 = vld [vmem:[%s1 + $0x114] sm:$0xf]
    %v76 = vld [vmem:[%s1 + $0x118] sm:$0xff]
    %v77 = vld [vmem:[%s1 + $0x120] sm:$0xff]
    %v78 = vld [vmem:[%s1 + $0x128] sm:$0xff]
    %v79 = vld [vmem:[%s1 + $0x130] sm:$0xf]
    %v80 = vld [vmem:[%s1 + $0x134] sm:$0xff]
    %v81 = vld [vmem:[%s1 + $0x13c] sm:$0xff]
    %v82 = vld [vmem:[%s1 + $0x144] sm:$0xff]
    %v83 = vld [vmem:[%s1 + $0x14c] sm:$0xf]
    %v84 = vld [vmem:[%s1 + $0x150] sm:$0xff]
    %v85 = vld [vmem:[%s1 + $0x158] sm:$0xff]
    %v86 = vld [vmem:[%s1 + $0x160] sm:$0xff]
    %v87 = vld [vmem:[%s1 + $0x168] sm:$0xf]
    %v88 = vld [vmem:[%s1 + $0x16c] sm:$0xff]
    %v89 = vld [vmem:[%s1 + $0x174] sm:$0xff]
    %v90 = vld [vmem:[%s1 + $0x17c] sm:$0xff]
    %v91 = vld [vmem:[%s1 + $0x184] sm:$0xf]
    %v92 = vld [vmem:[%s1 + $0x188] sm:$0xff]
    %v93 = vld [vmem:[%s1 + $0x190] sm:$0xff]
    %v94 = vld [vmem:[%s1 + $0x198] sm:$0xff]
    %v95 = vld [vmem:[%s1 + $0x1a0] sm:$0xf]
    %v96 = vld [vmem:[%s1 + $0x1a4] sm:$0xff]
    %v97 = vld [vmem:[%s1 + $0x1ac] sm:$0xff]
    %v98 = vld [vmem:[%s1 + $0x1b4] sm:$0xff]
    %v99 = vld [vmem:[%s1 + $0x1bc] sm:$0xf]
    %v100 = vld [vmem:[%s1 + $0x1c0] sm:$0xff]
    %v101 = vld [vmem:[%s1 + $0x1c8] sm:$0xff]
    %v102 = vld [vmem:[%s1 + $0x1d0] sm:$0xff]
    %v103 = vld [vmem:[%s1 + $0x1d8] sm:$0xf]
    %v104 = vld [vmem:[%s1 + $0x1dc] sm:$0xff]
    %v105 = vld [vmem:[%s1 + $0x1e4] sm:$0xff]
    %v106 = vld [vmem:[%s1 + $0x1ec] sm:$0xff]
    %v107 = vld [vmem:[%s1 + $0x1f4] sm:$0xf]
    %v108 = vld [vmem:[%s1 + $0x1f8] sm:$0xff]
    %v109 = vld [vmem:[%s1 + $0x200] sm:$0xff]
    %v110 = vld [vmem:[%s1 + $0x208] sm:$0xff]
    %v111 = vld [vmem:[%s1 + $0x210] sm:$0xf]
    %v112 = vld [vmem:[%s1 + $0x214] sm:$0xff]
    %v113 = vld [vmem:[%s1 + $0x21c] sm:$0xff]
    %v114 = vld [vmem:[%s1 + $0x224] sm:$0xff]
    %v115 = vld [vmem:[%s1 + $0x22c] sm:$0xf]
    %v116 = vld [vmem:[%s1 + $0x230] sm:$0xff]
    %v117 = vld [vmem:[%s1 + $0x238] sm:$0xff]
    %v118 = vld [vmem:[%s1 + $0x240] sm:$0xff]
    %v119 = vld [vmem:[%s1 + $0x248] sm:$0xf]
    %v120 = vld [vmem:[%s1 + $0x24c] sm:$0xff]
    %v121 = vld [vmem:[%s1 + $0x254] sm:$0xff]
    %v122 = vld [vmem:[%s1 + $0x25c] sm:$0xff]
    %v123 = vld [vmem:[%s1 + $0x264] sm:$0xf]
    %v124 = vld [vmem:[%s1 + $0x268] sm:$0xff]
    %v125 = vld [vmem:[%s1 + $0x270] sm:$0xff]
    %v126 = vld [vmem:[%s1 + $0x278] sm:$0xff]
    %v127 = vld [vmem:[%s1 + $0x280] sm:$0xf]
    %v128 = vld [vmem:[%s1 + $0x284] sm:$0xff]
    %v129 = vld [vmem:[%s1 + $0x28c] sm:$0xff]
    %v130 = vld [vmem:[%s1 + $0x294] sm:$0xff]
    %v131 = vld [vmem:[%s1 + $0x29c] sm:$0xf]
    %v132 = vld [vmem:[%s1 + $0x2a0] sm:$0xff]
    %v133 = vld [vmem:[%s1 + $0x2a8] sm:$0xff]
    %v134 = vld [vmem:[%s1 + $0x2b0] sm:$0xff]
    %v135 = vld [vmem:[%s1 + $0x2b8] sm:$0xf]
    %v136 = vld [vmem:[%s1 + $0x2bc] sm:$0xff]
    %v137 = vld [vmem:[%s1 + $0x2c4] sm:$0xff]
    %v138 = vld [vmem:[%s1 + $0x2cc] sm:$0xff]
    %v139 = vld [vmem:[%s1 + $0x2d4] sm:$0xf]
    %v140 = vld [vmem:[%s1 + $0x2d8] sm:$0xff]
    %v141 = vld [vmem:[%s1 + $0x2e0] sm:$0xff]
    %v142 = vld [vmem:[%s1 + $0x2e8] sm:$0xff]
    %v143 = vld [vmem:[%s1 + $0x2f0] sm:$0xf]
    %v144 = vld [vmem:[%s1 + $0x2f4] sm:$0xff]
    %v145 = vld [vmem:[%s1 + $0x2fc] sm:$0xff]
    %v146 = vld [vmem:[%s1 + $0x304] sm:$0xff]
    %v147 = vld [vmem:[%s1 + $0x30c] sm:$0xf]
    %v148 = vld [vmem:[%s1 + $0x310] sm:$0xff]
    %v149 = vld [vmem:[%s1 + $0x318] sm:$0xff]
    %v150 = vld [vmem:[%s1 + $0x320] sm:$0xff]
    %v151 = vld [vmem:[%s1 + $0x328] sm:$0xf]
    %v152 = vld [vmem:[%s1 + $0x32c] sm:$0xff]
    %v153 = vld [vmem:[%s1 + $0x334] sm:$0xff]
    %v154 = vld [vmem:[%s1 + $0x33c] sm:$0xff]
    %v155 = vld [vmem:[%s1 + $0x344] sm:$0xf]
    %v156 = vld [vmem:[%s1 + $0x348] sm:$0xff]
    %v157 = vld [vmem:[%s1 + $0x350] sm:$0xff]
    %v158 = vld [vmem:[%s1 + $0x358] sm:$0xff]
    %v159 = vld [vmem:[%s1 + $0x360] sm:$0xf]
    %v160 = vld [vmem:[%s1 + $0x364] sm:$0xff]
    %v161 = vld [vmem:[%s1 + $0x36c] sm:$0xff]
    %v162 = vld [vmem:[%s1 + $0x374] sm:$0xff]
    %v163 = vld [vmem:[%s1 + $0x37c] sm:$0xf]
    %v164 = vld [vmem:[%s1 + $0x380] sm:$0xff]
    %v165 = vld [vmem:[%s1 + $0x388] sm:$0xff]
    %v166 = vld [vmem:[%s1 + $0x390] sm:$0xff]
    %v167 = vld [vmem:[%s1 + $0x398] sm:$0xf]
    %v168 = vld [vmem:[%s1 + $0x39c] sm:$0xff]
    %v169 = vld [vmem:[%s1 + $0x3a4] sm:$0xff]
    %v170 = vld [vmem:[%s1 + $0x3ac] sm:$0xff]
    %v171 = vld [vmem:[%s1 + $0x3b4] sm:$0xf]
    %v172 = vld [vmem:[%s1 + $0x3b8] sm:$0xff]
    %v173 = vld [vmem:[%s1 + $0x3c0] sm:$0xff]
    %v174 = vld [vmem:[%s1 + $0x3c8] sm:$0xff]
    %v175 = vld [vmem:[%s1 + $0x3d0] sm:$0xf]
    %v176 = vld [vmem:[%s1 + $0x3d4] sm:$0xff]
    %v177 = vld [vmem:[%s1 + $0x3dc] sm:$0xff]
    %v178 = vld [vmem:[%s1 + $0x3e4] sm:$0xff]
    %v179 = vld [vmem:[%s1 + $0x3ec] sm:$0xf]
    %v180 = vld [vmem:[%s1 + $0x3f0] sm:$0xff]
    %v181 = vld [vmem:[%s1 + $0x3f8] sm:$0xff]
    %v182 = vld [vmem:[%s1 + $0x400] sm:$0xff]
    %v183 = vld [vmem:[%s1 + $0x408] sm:$0xf]
    %v184 = vld [vmem:[%s1 + $0x40c] sm:$0xff]
    %v185 = vld [vmem:[%s1 + $0x414] sm:$0xff]
    %v186 = vld [vmem:[%s1 + $0x41c] sm:$0xff]
    %v187 = vld [vmem:[%s1 + $0x424] sm:$0xf]
    %v188 = vld [vmem:[%s1 + $0x428] sm:$0xff]
    %v189 = vld [vmem:[%s1 + $0x430] sm:$0xff]
    %v190 = vld [vmem:[%s1 + $0x438] sm:$0xff]
    %v191 = vld [vmem:[%s1 + $0x440] sm:$0xf]
    %v192 = vld [vmem:[%s1 + $0x444] sm:$0xff]
    %v193 = vld [vmem:[%s1 + $0x44c] sm:$0xff]
    %v194 = vld [vmem:[%s1 + $0x454] sm:$0xff]
    %v195 = vld [vmem:[%s1 + $0x45c] sm:$0xf]
    %v196 = vld [vmem:[%s1 + $0x460] sm:$0xff]
    %v197 = vld [vmem:[%s1 + $0x468] sm:$0xff]
    %v198 = vld [vmem:[%s1 + $0x470] sm:$0xff]
    %v199 = vld [vmem:[%s1 + $0x478] sm:$0xf]
    %v200 = vld [vmem:[%s1 + $0x47c] sm:$0xff]
    %v201 = vld [vmem:[%s1 + $0x484] sm:$0xff]
    %v202 = vld [vmem:[%s1 + $0x48c] sm:$0xff]
    %v203 = vld [vmem:[%s1 + $0x494] sm:$0xf]
    %v204 = vld [vmem:[%s1 + $0x498] sm:$0xff]
    %v205 = vld [vmem:[%s1 + $0x4a0] sm:$0xff]
    %v206 = vld [vmem:[%s1 + $0x4a8] sm:$0xff]
    %v207 = vld [vmem:[%s1 + $0x4b0] sm:$0xf]
    %v208 = vld [vmem:[%s1 + $0x4b4] sm:$0xff]
    %v209 = vld [vmem:[%s1 + $0x4bc] sm:$0xff]
    %v210 = vld [vmem:[%s1 + $0x4c4] sm:$0xff]
    %v211 = vld [vmem:[%s1 + $0x4cc] sm:$0xf]
    %v212 = vld [vmem:[%s1 + $0x4d0] sm:$0xff]
    %v213 = vld [vmem:[%s1 + $0x4d8] sm:$0xff]
    %v214 = vld [vmem:[%s1 + $0x4e0] sm:$0xff]
    %v215 = vld [vmem:[%s1 + $0x4e8] sm:$0xf]
    %v216 = vld [vmem:[%s1 + $0x4ec] sm:$0xff]
    %v217 = vld [vmem:[%s1 + $0x4f4] sm:$0xff]
    %v218 = vld [vmem:[%s1 + $0x4fc] sm:$0xff]
    %v219 = vld [vmem:[%s1 + $0x504] sm:$0xf]
    %v220 = vld [vmem:[%s1 + $0x508] sm:$0xff]
    %v221 = vld [vmem:[%s1 + $0x510] sm:$0xff]
    %v222 = vld [vmem:[%s1 + $0x518] sm:$0xff]
    %v223 = vld [vmem:[%s1 + $0x520] sm:$0xf]
    %v224 = vld [vmem:[%s1 + $0x524] sm:$0xff]
    %v225 = vld [vmem:[%s1 + $0x52c] sm:$0xff]
    %v226 = vld [vmem:[%s1 + $0x534] sm:$0xff]
    %v227 = vld [vmem:[%s1 + $0x53c] sm:$0xf]
    %v228 = vld [vmem:[%s1 + $0x540] sm:$0xff]
    %v229 = vld [vmem:[%s1 + $0x548] sm:$0xff]
    %v230 = vld [vmem:[%s1 + $0x550] sm:$0xff]
    %v231 = vld [vmem:[%s1 + $0x558] sm:$0xf]
    %v232 = vld [vmem:[%s1 + $0x55c] sm:$0xff]
    %v233 = vld [vmem:[%s1 + $0x564] sm:$0xff]
    %v234 = vld [vmem:[%s1 + $0x56c] sm:$0xff]
    %v235 = vld [vmem:[%s1 + $0x574] sm:$0xf]
    %v236 = vld [vmem:[%s1 + $0x578] sm:$0xff]
    %v237 = vld [vmem:[%s1 + $0x580] sm:$0xff]
    %v238 = vld [vmem:[%s1 + $0x588] sm:$0xff]
    %v239 = vld [vmem:[%s1 + $0x590] sm:$0xf]
    %v240 = vld [vmem:[%s1 + $0x594] sm:$0xff]
    %v241 = vld [vmem:[%s1 + $0x59c] sm:$0xff]
    %v242 = vld [vmem:[%s1 + $0x5a4] sm:$0xff]
    %v243 = vld [vmem:[%s1 + $0x5ac] sm:$0xf]
    %v244 = vld [vmem:[%s1 + $0x5b0] sm:$0xff]
    %v245 = vld [vmem:[%s1 + $0x5b8] sm:$0xff]
    %v246 = vld [vmem:[%s1 + $0x5c0] sm:$0xff]
    %v247 = vld [vmem:[%s1 + $0x5c8] sm:$0xf]
    %v248 = vld [vmem:[%s1 + $0x5cc] sm:$0xff]
    %v249 = vld [vmem:[%s1 + $0x5d4] sm:$0xff]
    %v250 = vld [vmem:[%s1 + $0x5dc] sm:$0xff]
    %v251 = vld [vmem:[%s1 + $0x5e4] sm:$0xf]
    %v252 = vld [vmem:[%s1 + $0x5e8] sm:$0xff]
    %v253 = vld [vmem:[%s1 + $0x5f0] sm:$0xff]
    %v254 = vld [vmem:[%s1 + $0x5f8] sm:$0xff]
    %v255 = vld [vmem:[%s1 + $0x600] sm:$0xf]
    %v256 = vld [vmem:[%s1 + $0x604] sm:$0xff]
    %v257 = vld [vmem:[%s1 + $0x60c] sm:$0xff]
    %v258 = vld [vmem:[%s1 + $0x614] sm:$0xff]
    %v259 = vld [vmem:[%s1 + $0x61c] sm:$0xf]
    %v260 = vld [vmem:[%s1 + $0x620] sm:$0xff]
    %v261 = vld [vmem:[%s1 + $0x628] sm:$0xff]
    %v262 = vld [vmem:[%s1 + $0x630] sm:$0xff]
    %v263 = vld [vmem:[%s1 + $0x638] sm:$0xf]
    %v264 = vld [vmem:[%s1 + $0x63c] sm:$0xff]
    %v265 = vld [vmem:[%s1 + $0x644] sm:$0xff]
    %v266 = vld [vmem:[%s1 + $0x64c] sm:$0xff]
    %v267 = vld [vmem:[%s1 + $0x654] sm:$0xf]
    %v268 = vld [vmem:[%s1 + $0x658] sm:$0xff]
    %v269 = vld [vmem:[%s1 + $0x660] sm:$0xff]
    %v270 = vld [vmem:[%s1 + $0x668] sm:$0xff]
    %v271 = vld [vmem:[%s1 + $0x670] sm:$0xf]
    %v272 = vld [vmem:[%s1 + $0x674] sm:$0xff]
    %v273 = vld [vmem:[%s1 + $0x67c] sm:$0xff]
    %v274 = vld [vmem:[%s1 + $0x684] sm:$0xff]
    %v275 = vld [vmem:[%s1 + $0x68c] sm:$0xf]
    %v276 = vld [vmem:[%s1 + $0x690] sm:$0xff]
    %v277 = vld [vmem:[%s1 + $0x698] sm:$0xff]
    %v278 = vld [vmem:[%s1 + $0x6a0] sm:$0xff]
    %v279 = vld [vmem:[%s1 + $0x6a8] sm:$0xf]
    %v280 = vld [vmem:[%s1 + $0x6ac] sm:$0xff]
    %v281 = vld [vmem:[%s1 + $0x6b4] sm:$0xff]
    %v282 = vld [vmem:[%s1 + $0x6bc] sm:$0xff]
    %v283 = vld [vmem:[%s1 + $0x6c4] sm:$0xf]
    %v284 = vld [vmem:[%s1 + $0x6c8] sm:$0xff]
    %v285 = vld [vmem:[%s1 + $0x6d0] sm:$0xff]
    %v286 = vld [vmem:[%s1 + $0x6d8] sm:$0xff]
    %v287 = vld [vmem:[%s1 + $0x6e0] sm:$0xf]
    %v288 = vld [vmem:[%s1 + $0x6e4] sm:$0xff]
    %v289 = vld [vmem:[%s1 + $0x6ec] sm:$0xff]
    %v290 = vld [vmem:[%s1 + $0x6f4] sm:$0xff]
    %v291 = vld [vmem:[%s1 + $0x6fc] sm:$0xf]
    %v292 = vld [vmem:[%s1 + $0x700] sm:$0xff]
    %v293 = vld [vmem:[%s1 + $0x708] sm:$0xff]
    %v294 = vld [vmem:[%s1 + $0x710] sm:$0xff]
    %v295 = vld [vmem:[%s1 + $0x718] sm:$0xf]
    %v296 = vld [vmem:[%s1 + $0x71c] sm:$0xff]
    %v297 = vld [vmem:[%s1 + $0x724] sm:$0xff]
    %v298 = vld [vmem:[%s1 + $0x72c] sm:$0xff]
    %v299 = vld [vmem:[%s1 + $0x734] sm:$0xf]
    %v300 = vld [vmem:[%s1 + $0x738] sm:$0xff]
    %v301 = vld [vmem:[%s1 + $0x740] sm:$0xff]
    %v302 = vld [vmem:[%s1 + $0x748] sm:$0xff]
    %v303 = vld [vmem:[%s1 + $0x750] sm:$0xf]
    %v304 = vld [vmem:[%s1 + $0x754] sm:$0xff]
    %v305 = vld [vmem:[%s1 + $0x75c] sm:$0xff]
    %v306 = vld [vmem:[%s1 + $0x764] sm:$0xff]
    %v307 = vld [vmem:[%s1 + $0x76c] sm:$0xf]
    %v308 = vld [vmem:[%s1 + $0x770] sm:$0xff]
    %v309 = vld [vmem:[%s1 + $0x778] sm:$0xff]
    %v310 = vld [vmem:[%s1 + $0x780] sm:$0xff]
    %v311 = vld [vmem:[%s1 + $0x788] sm:$0xf]
    %v312 = vld [vmem:[%s1 + $0x78c] sm:$0xff]
    %v313 = vld [vmem:[%s1 + $0x794] sm:$0xff]
    %v314 = vld [vmem:[%s1 + $0x79c] sm:$0xff]
    %v315 = vld [vmem:[%s1 + $0x7a4] sm:$0xf]
    %v316 = vld [vmem:[%s1 + $0x7a8] sm:$0xff]
    %v317 = vld [vmem:[%s1 + $0x7b0] sm:$0xff]
    %v318 = vld [vmem:[%s1 + $0x7b8] sm:$0xff]
    %v319 = vld [vmem:[%s1 + $0x7c0] sm:$0xf]
    %v320 = vld [vmem:[%s1 + $0x7c4] sm:$0xff]
    %v321 = vld [vmem:[%s1 + $0x7cc] sm:$0xff]
    %v322 = vld [vmem:[%s1 + $0x7d4] sm:$0xff]
    %v323 = vld [vmem:[%s1 + $0x7dc] sm:$0xf]
    %v324 = vld [vmem:[%s1 + $0x7e0] sm:$0xff]
    %v325 = vld [vmem:[%s1 + $0x7e8] sm:$0xff]
    %v326 = vld [vmem:[%s1 + $0x7f0] sm:$0xff]
    %v327 = vld [vmem:[%s1 + $0x7f8] sm:$0xf]
    %v328 = vld [vmem:[%s1 + $0x7fc] sm:$0xff]
    %v329 = vld [vmem:[%s1 + $0x804] sm:$0xff]
    %v330 = vld [vmem:[%s1 + $0x80c] sm:$0xff]
    %v331 = vld [vmem:[%s1 + $0x814] sm:$0xf]
    %v332 = vld [vmem:[%s1 + $0x818] sm:$0xff]
    %v333 = vld [vmem:[%s1 + $0x820] sm:$0xff]
    %v334 = vld [vmem:[%s1 + $0x828] sm:$0xff]
    %v335 = vld [vmem:[%s1 + $0x830] sm:$0xf]
    %v336 = vld [vmem:[%s1 + $0x834] sm:$0xff]
    %v337 = vld [vmem:[%s1 + $0x83c] sm:$0xff]
    %v338 = vld [vmem:[%s1 + $0x844] sm:$0xff]
    %v339 = vld [vmem:[%s1 + $0x84c] sm:$0xf]
    %v340 = vld [vmem:[%s1 + $0x850] sm:$0xff]
    %v341 = vld [vmem:[%s1 + $0x858] sm:$0xff]
    %v342 = vld [vmem:[%s1 + $0x860] sm:$0xff]
    %v343 = vld [vmem:[%s1 + $0x868] sm:$0xf]
    %v344 = vld [vmem:[%s1 + $0x86c] sm:$0xff]
    %v345 = vld [vmem:[%s1 + $0x874] sm:$0xff]
    %v346 = vld [vmem:[%s1 + $0x87c] sm:$0xff]
    %v347 = vld [vmem:[%s1 + $0x884] sm:$0xf]
    %v348 = vld [vmem:[%s1 + $0x888] sm:$0xff]
    %v349 = vld [vmem:[%s1 + $0x890] sm:$0xff]
    %v350 = vld [vmem:[%s1 + $0x898] sm:$0xff]
    %v351 = vld [vmem:[%s1 + $0x8a0] sm:$0xf]
    %v352 = vld [vmem:[%s1 + $0x8a4] sm:$0xff]
    %v353 = vld [vmem:[%s1 + $0x8ac] sm:$0xff]
    %v354 = vld [vmem:[%s1 + $0x8b4] sm:$0xff]
    %v355 = vld [vmem:[%s1 + $0x8bc] sm:$0xf]
    %v356 = vld [vmem:[%s1 + $0x8c0] sm:$0xff]
    %v357 = vld [vmem:[%s1 + $0x8c8] sm:$0xff]
    %v358 = vld [vmem:[%s1 + $0x8d0] sm:$0xff]
    %v359 = vld [vmem:[%s1 + $0x8d8] sm:$0xf]
    %v360 = vld [vmem:[%s1 + $0x8dc] sm:$0xff]
    %v361 = vld [vmem:[%s1 + $0x8e4] sm:$0xff]
    %v362 = vld [vmem:[%s1 + $0x8ec] sm:$0xff]
    %v363 = vld [vmem:[%s1 + $0x8f4] sm:$0xf]
    %v364 = vld [vmem:[%s1 + $0x8f8] sm:$0xff]
    %v365 = vld [vmem:[%s1 + $0x900] sm:$0xff]
    %v366 = vld [vmem:[%s1 + $0x908] sm:$0xff]
    %v367 = vld [vmem:[%s1 + $0x910] sm:$0xf]
    %v368 = vld [vmem:[%s1 + $0x914] sm:$0xff]
    %v369 = vld [vmem:[%s1 + $0x91c] sm:$0xff]
    %v370 = vld [vmem:[%s1 + $0x924] sm:$0xff]
    %v371 = vld [vmem:[%s1 + $0x92c] sm:$0xf]
    %v372 = vld [vmem:[%s1 + $0x930] sm:$0xff]
    %v373 = vld [vmem:[%s1 + $0x938] sm:$0xff]
    %v374 = vld [vmem:[%s1 + $0x940] sm:$0xff]
    %v375 = vld [vmem:[%s1 + $0x948] sm:$0xf]
    %v376 = vld [vmem:[%s1 + $0x94c] sm:$0xff]
    %v377 = vld [vmem:[%s1 + $0x954] sm:$0xff]
    %v378 = vld [vmem:[%s1 + $0x95c] sm:$0xff]
    %v379 = vld [vmem:[%s1 + $0x964] sm:$0xf]
    %v380 = vld [vmem:[%s1 + $0x968] sm:$0xff]
    %v381 = vld [vmem:[%s1 + $0x970] sm:$0xff]
    %v382 = vld [vmem:[%s1 + $0x978] sm:$0xff]
    %v383 = vld [vmem:[%s1 + $0x980] sm:$0xf]
    %v384 = vld [vmem:[%s1 + $0x984] sm:$0xff]
    %v385 = vld [vmem:[%s1 + $0x98c] sm:$0xff]
    %v386 = vld [vmem:[%s1 + $0x994] sm:$0xff]
    %v387 = vld [vmem:[%s1 + $0x99c] sm:$0xf]
    %v388 = vld [vmem:[%s1 + $0x9a0] sm:$0xff]
    %v389 = vld [vmem:[%s1 + $0x9a8] sm:$0xff]
    %v390 = vld [vmem:[%s1 + $0x9b0] sm:$0xff]
    %v391 = vld [vmem:[%s1 + $0x9b8] sm:$0xf]
    %v392 = vld [vmem:[%s1 + $0x9bc] sm:$0xff]
    %v393 = vld [vmem:[%s1 + $0x9c4] sm:$0xff]
    %v394 = vld [vmem:[%s1 + $0x9cc] sm:$0xff]
    %v395 = vld [vmem:[%s1 + $0x9d4] sm:$0xf]
    %v396 = vld [vmem:[%s1 + $0x9d8] sm:$0xff]
    %v397 = vld [vmem:[%s1 + $0x9e0] sm:$0xff]
    %v398 = vld [vmem:[%s1 + $0x9e8] sm:$0xff]
    %v399 = vld [vmem:[%s1 + $0x9f0] sm:$0xf]
    %v400 = vld [vmem:[%s1 + $0x9f4] sm:$0xff]
    %v401 = vld [vmem:[%s1 + $0x9fc] sm:$0xff]
    %v402 = vld [vmem:[%s1 + $0xa04] sm:$0xff]
    %v403 = vld [vmem:[%s1 + $0xa0c] sm:$0xf]
    %v404 = vld [vmem:[%s1 + $0xa10] sm:$0xff]
    %v405 = vld [vmem:[%s1 + $0xa18] sm:$0xff]
    %v406 = vld [vmem:[%s1 + $0xa20] sm:$0xff]
    %v407 = vld [vmem:[%s1 + $0xa28] sm:$0xf]
    %v408 = vld [vmem:[%s1 + $0xa2c] sm:$0xff]
    %v409 = vld [vmem:[%s1 + $0xa34] sm:$0xff]
    %v410 = vld [vmem:[%s1 + $0xa3c] sm:$0xff]
    %v411 = vld [vmem:[%s1 + $0xa44] sm:$0xf]
    %v412 = vld [vmem:[%s1 + $0xa48] sm:$0xff]
    %v413 = vld [vmem:[%s1 + $0xa50] sm:$0xff]
    %v414 = vld [vmem:[%s1 + $0xa58] sm:$0xff]
    %v415 = vld [vmem:[%s1 + $0xa60] sm:$0xf]
    %v416 = vld [vmem:[%s1 + $0xa64] sm:$0xff]
    %v417 = vld [vmem:[%s1 + $0xa6c] sm:$0xff]
    %v418 = vld [vmem:[%s1 + $0xa74] sm:$0xff]
    %v419 = vld [vmem:[%s1 + $0xa7c] sm:$0xf]
    %v420 = vld [vmem:[%s1 + $0xa80] sm:$0xff]
    %v421 = vld [vmem:[%s1 + $0xa88] sm:$0xff]
    %v422 = vld [vmem:[%s1 + $0xa90] sm:$0xff]
    %v423 = vld [vmem:[%s1 + $0xa98] sm:$0xf]
    %v424 = vld [vmem:[%s1 + $0xa9c] sm:$0xff]
    %v425 = vld [vmem:[%s1 + $0xaa4] sm:$0xff]
    %v426 = vld [vmem:[%s1 + $0xaac] sm:$0xff]
    %v427 = vld [vmem:[%s1 + $0xab4] sm:$0xf]
    %v428 = vld [vmem:[%s2] sm:$0xff]
    %v430 = vlaneseq
    %v431 = vshrl.u32 %v430, 7
    %v432 = vsub.s32 0, %v431
    %v433 = vrot.slane %v428, %v432
    %v434 = vlaneseq
    %v435 = vshrl.u32 %v434, 7
    %v436 = vsub.s32 1, %v435
    %v437 = vrot.slane %v428, %v436
    %v438 = vlaneseq
    %v439 = vshrl.u32 %v438, 7
    %v440 = vsub.s32 2, %v439
    %v441 = vrot.slane %v428, %v440
    %v442 = vlaneseq
    %v443 = vshrl.u32 %v442, 7
    %v444 = vsub.s32 3, %v443
    %v445 = vrot.slane %v428, %v444
    %v446 = vlaneseq
    %v447 = vshrl.u32 %v446, 7
    %v448 = vsub.s32 4, %v447
    %v449 = vrot.slane %v428, %v448
    %v450 = vlaneseq
    %v451 = vshrl.u32 %v450, 7
    %v452 = vsub.s32 5, %v451
    %v453 = vrot.slane %v428, %v452
    %v454 = vlaneseq
    %v455 = vshrl.u32 %v454, 7
    %v456 = vsub.s32 6, %v455
    %v457 = vrot.slane %v428, %v456
    %v857 = vunpack.c.l.b16 %v36
    %v858 = vunpack.c.h.b16 %v36
    %v859 = vunpack.c.l.b16 %v37
    %v860 = vunpack.c.h.b16 %v37
    %v861 = vunpack.c.l.b16 %v38
    %v862 = vunpack.c.h.b16 %v38
    %v863 = vunpack.c.l.b16 %v39
    %v864 = vunpack.c.l.b16 %v40
    %v865 = vunpack.c.h.b16 %v40
    %v866 = vunpack.c.l.b16 %v41
    %v867 = vunpack.c.h.b16 %v41
    %v868 = vunpack.c.l.b16 %v42
    %v869 = vunpack.c.h.b16 %v42
    %v870 = vunpack.c.l.b16 %v43
    %v871 = vunpack.c.l.b16 %v44
    %v872 = vunpack.c.h.b16 %v44
    %v873 = vunpack.c.l.b16 %v45
    %v874 = vunpack.c.h.b16 %v45
    %v875 = vunpack.c.l.b16 %v46
    %v876 = vunpack.c.h.b16 %v46
    %v877 = vunpack.c.l.b16 %v47
    %v878 = vunpack.c.l.b16 %v48
    %v879 = vunpack.c.h.b16 %v48
    %v880 = vunpack.c.l.b16 %v49
    %v881 = vunpack.c.h.b16 %v49
    %v882 = vunpack.c.l.b16 %v50
    %v883 = vunpack.c.h.b16 %v50
    %v884 = vunpack.c.l.b16 %v51
    %v885 = vunpack.c.l.b16 %v52
    %v886 = vunpack.c.h.b16 %v52
    %v887 = vunpack.c.l.b16 %v53
    %v888 = vunpack.c.h.b16 %v53
    %v889 = vunpack.c.l.b16 %v54
    %v890 = vunpack.c.h.b16 %v54
    %v891 = vunpack.c.l.b16 %v55
    %v892 = vunpack.c.l.b16 %v56
    %v893 = vunpack.c.h.b16 %v56
    %v894 = vunpack.c.l.b16 %v57
    %v895 = vunpack.c.h.b16 %v57
    %v896 = vunpack.c.l.b16 %v58
    %v897 = vunpack.c.h.b16 %v58
    %v898 = vunpack.c.l.b16 %v59
    %v899 = vunpack.c.l.b16 %v60
    %v900 = vunpack.c.h.b16 %v60
    %v901 = vunpack.c.l.b16 %v61
    %v902 = vunpack.c.h.b16 %v61
    %v903 = vunpack.c.l.b16 %v62
    %v904 = vunpack.c.h.b16 %v62
    %v905 = vunpack.c.l.b16 %v63
    %v906 = vunpack.c.l.b16 %v64
    %v907 = vunpack.c.h.b16 %v64
    %v908 = vunpack.c.l.b16 %v65
    %v909 = vunpack.c.h.b16 %v65
    %v910 = vunpack.c.l.b16 %v66
    %v911 = vunpack.c.h.b16 %v66
    %v912 = vunpack.c.l.b16 %v67
    %v913 = vunpack.c.l.b16 %v68
    %v914 = vunpack.c.h.b16 %v68
    %v915 = vunpack.c.l.b16 %v69
    %v916 = vunpack.c.h.b16 %v69
    %v917 = vunpack.c.l.b16 %v70
    %v918 = vunpack.c.h.b16 %v70
    %v919 = vunpack.c.l.b16 %v71
    %v920 = vunpack.c.l.b16 %v72
    %v921 = vunpack.c.h.b16 %v72
    %v922 = vunpack.c.l.b16 %v73
    %v923 = vunpack.c.h.b16 %v73
    %v924 = vunpack.c.l.b16 %v74
    %v925 = vunpack.c.h.b16 %v74
    %v926 = vunpack.c.l.b16 %v75
    %v927 = vunpack.c.l.b16 %v76
    %v928 = vunpack.c.h.b16 %v76
    %v929 = vunpack.c.l.b16 %v77
    %v930 = vunpack.c.h.b16 %v77
    %v931 = vunpack.c.l.b16 %v78
    %v932 = vunpack.c.h.b16 %v78
    %v933 = vunpack.c.l.b16 %v79
    %v934 = vunpack.c.l.b16 %v80
    %v935 = vunpack.c.h.b16 %v80
    %v936 = vunpack.c.l.b16 %v81
    %v937 = vunpack.c.h.b16 %v81
    %v938 = vunpack.c.l.b16 %v82
    %v939 = vunpack.c.h.b16 %v82
    %v940 = vunpack.c.l.b16 %v83
    %v941 = vunpack.c.l.b16 %v84
    %v942 = vunpack.c.h.b16 %v84
    %v943 = vunpack.c.l.b16 %v85
    %v944 = vunpack.c.h.b16 %v85
    %v945 = vunpack.c.l.b16 %v86
    %v946 = vunpack.c.h.b16 %v86
    %v947 = vunpack.c.l.b16 %v87
    %v948 = vunpack.c.l.b16 %v88
    %v949 = vunpack.c.h.b16 %v88
    %v950 = vunpack.c.l.b16 %v89
    %v951 = vunpack.c.h.b16 %v89
    %v952 = vunpack.c.l.b16 %v90
    %v953 = vunpack.c.h.b16 %v90
    %v954 = vunpack.c.l.b16 %v91
    %v955 = vunpack.c.l.b16 %v92
    %v956 = vunpack.c.h.b16 %v92
    %v957 = vunpack.c.l.b16 %v93
    %v958 = vunpack.c.h.b16 %v93
    %v959 = vunpack.c.l.b16 %v94
    %v960 = vunpack.c.h.b16 %v94
    %v961 = vunpack.c.l.b16 %v95
    %v962 = vunpack.c.l.b16 %v96
    %v963 = vunpack.c.h.b16 %v96
    %v964 = vunpack.c.l.b16 %v97
    %v965 = vunpack.c.h.b16 %v97
    %v966 = vunpack.c.l.b16 %v98
    %v967 = vunpack.c.h.b16 %v98
    %v968 = vunpack.c.l.b16 %v99
    %v969 = vunpack.c.l.b16 %v100
    %v970 = vunpack.c.h.b16 %v100
    %v971 = vunpack.c.l.b16 %v101
    %v972 = vunpack.c.h.b16 %v101
    %v973 = vunpack.c.l.b16 %v102
    %v974 = vunpack.c.h.b16 %v102
    %v975 = vunpack.c.l.b16 %v103
    %v976 = vunpack.c.l.b16 %v104
    %v977 = vunpack.c.h.b16 %v104
    %v978 = vunpack.c.l.b16 %v105
    %v979 = vunpack.c.h.b16 %v105
    %v980 = vunpack.c.l.b16 %v106
    %v981 = vunpack.c.h.b16 %v106
    %v982 = vunpack.c.l.b16 %v107
    %v983 = vunpack.c.l.b16 %v108
    %v984 = vunpack.c.h.b16 %v108
    %v985 = vunpack.c.l.b16 %v109
    %v986 = vunpack.c.h.b16 %v109
    %v987 = vunpack.c.l.b16 %v110
    %v988 = vunpack.c.h.b16 %v110
    %v989 = vunpack.c.l.b16 %v111
    %v990 = vunpack.c.l.b16 %v112
    %v991 = vunpack.c.h.b16 %v112
    %v992 = vunpack.c.l.b16 %v113
    %v993 = vunpack.c.h.b16 %v113
    %v994 = vunpack.c.l.b16 %v114
    %v995 = vunpack.c.h.b16 %v114
    %v996 = vunpack.c.l.b16 %v115
    %v997 = vunpack.c.l.b16 %v116
    %v998 = vunpack.c.h.b16 %v116
    %v999 = vunpack.c.l.b16 %v117
    %v1000 = vunpack.c.h.b16 %v117
    %v1001 = vunpack.c.l.b16 %v118
    %v1002 = vunpack.c.h.b16 %v118
    %v1003 = vunpack.c.l.b16 %v119
    %v1004 = vunpack.c.l.b16 %v120
    %v1005 = vunpack.c.h.b16 %v120
    %v1006 = vunpack.c.l.b16 %v121
    %v1007 = vunpack.c.h.b16 %v121
    %v1008 = vunpack.c.l.b16 %v122
    %v1009 = vunpack.c.h.b16 %v122
    %v1010 = vunpack.c.l.b16 %v123
    %v1011 = vunpack.c.l.b16 %v124
    %v1012 = vunpack.c.h.b16 %v124
    %v1013 = vunpack.c.l.b16 %v125
    %v1014 = vunpack.c.h.b16 %v125
    %v1015 = vunpack.c.l.b16 %v126
    %v1016 = vunpack.c.h.b16 %v126
    %v1017 = vunpack.c.l.b16 %v127
    %v1018 = vunpack.c.l.b16 %v128
    %v1019 = vunpack.c.h.b16 %v128
    %v1020 = vunpack.c.l.b16 %v129
    %v1021 = vunpack.c.h.b16 %v129
    %v1022 = vunpack.c.l.b16 %v130
    %v1023 = vunpack.c.h.b16 %v130
    %v1024 = vunpack.c.l.b16 %v131
    %v1025 = vunpack.c.l.b16 %v132
    %v1026 = vunpack.c.h.b16 %v132
    %v1027 = vunpack.c.l.b16 %v133
    %v1028 = vunpack.c.h.b16 %v133
    %v1029 = vunpack.c.l.b16 %v134
    %v1030 = vunpack.c.h.b16 %v134
    %v1031 = vunpack.c.l.b16 %v135
    %v1032 = vunpack.c.l.b16 %v136
    %v1033 = vunpack.c.h.b16 %v136
    %v1034 = vunpack.c.l.b16 %v137
    %v1035 = vunpack.c.h.b16 %v137
    %v1036 = vunpack.c.l.b16 %v138
    %v1037 = vunpack.c.h.b16 %v138
    %v1038 = vunpack.c.l.b16 %v139
    %v1039 = vunpack.c.l.b16 %v140
    %v1040 = vunpack.c.h.b16 %v140
    %v1041 = vunpack.c.l.b16 %v141
    %v1042 = vunpack.c.h.b16 %v141
    %v1043 = vunpack.c.l.b16 %v142
    %v1044 = vunpack.c.h.b16 %v142
    %v1045 = vunpack.c.l.b16 %v143
    %v1046 = vunpack.c.l.b16 %v144
    %v1047 = vunpack.c.h.b16 %v144
    %v1048 = vunpack.c.l.b16 %v145
    %v1049 = vunpack.c.h.b16 %v145
    %v1050 = vunpack.c.l.b16 %v146
    %v1051 = vunpack.c.h.b16 %v146
    %v1052 = vunpack.c.l.b16 %v147
    %v1053 = vunpack.c.l.b16 %v148
    %v1054 = vunpack.c.h.b16 %v148
    %v1055 = vunpack.c.l.b16 %v149
    %v1056 = vunpack.c.h.b16 %v149
    %v1057 = vunpack.c.l.b16 %v150
    %v1058 = vunpack.c.h.b16 %v150
    %v1059 = vunpack.c.l.b16 %v151
    %v1060 = vunpack.c.l.b16 %v152
    %v1061 = vunpack.c.h.b16 %v152
    %v1062 = vunpack.c.l.b16 %v153
    %v1063 = vunpack.c.h.b16 %v153
    %v1064 = vunpack.c.l.b16 %v154
    %v1065 = vunpack.c.h.b16 %v154
    %v1066 = vunpack.c.l.b16 %v155
    %v1067 = vunpack.c.l.b16 %v156
    %v1068 = vunpack.c.h.b16 %v156
    %v1069 = vunpack.c.l.b16 %v157
    %v1070 = vunpack.c.h.b16 %v157
    %v1071 = vunpack.c.l.b16 %v158
    %v1072 = vunpack.c.h.b16 %v158
    %v1073 = vunpack.c.l.b16 %v159
    %v1074 = vunpack.c.l.b16 %v160
    %v1075 = vunpack.c.h.b16 %v160
    %v1076 = vunpack.c.l.b16 %v161
    %v1077 = vunpack.c.h.b16 %v161
    %v1078 = vunpack.c.l.b16 %v162
    %v1079 = vunpack.c.h.b16 %v162
    %v1080 = vunpack.c.l.b16 %v163
    %v1081 = vunpack.c.l.b16 %v164
    %v1082 = vunpack.c.h.b16 %v164
    %v1083 = vunpack.c.l.b16 %v165
    %v1084 = vunpack.c.h.b16 %v165
    %v1085 = vunpack.c.l.b16 %v166
    %v1086 = vunpack.c.h.b16 %v166
    %v1087 = vunpack.c.l.b16 %v167
    %v1088 = vunpack.c.l.b16 %v168
    %v1089 = vunpack.c.h.b16 %v168
    %v1090 = vunpack.c.l.b16 %v169
    %v1091 = vunpack.c.h.b16 %v169
    %v1092 = vunpack.c.l.b16 %v170
    %v1093 = vunpack.c.h.b16 %v170
    %v1094 = vunpack.c.l.b16 %v171
    %v1095 = vunpack.c.l.b16 %v172
    %v1096 = vunpack.c.h.b16 %v172
    %v1097 = vunpack.c.l.b16 %v173
    %v1098 = vunpack.c.h.b16 %v173
    %v1099 = vunpack.c.l.b16 %v174
    %v1100 = vunpack.c.h.b16 %v174
    %v1101 = vunpack.c.l.b16 %v175
    %v1102 = vunpack.c.l.b16 %v176
    %v1103 = vunpack.c.h.b16 %v176
    %v1104 = vunpack.c.l.b16 %v177
    %v1105 = vunpack.c.h.b16 %v177
    %v1106 = vunpack.c.l.b16 %v178
    %v1107 = vunpack.c.h.b16 %v178
    %v1108 = vunpack.c.l.b16 %v179
    %v1109 = vunpack.c.l.b16 %v180
    %v1110 = vunpack.c.h.b16 %v180
    %v1111 = vunpack.c.l.b16 %v181
    %v1112 = vunpack.c.h.b16 %v181
    %v1113 = vunpack.c.l.b16 %v182
    %v1114 = vunpack.c.h.b16 %v182
    %v1115 = vunpack.c.l.b16 %v183
    %v1116 = vunpack.c.l.b16 %v184
    %v1117 = vunpack.c.h.b16 %v184
    %v1118 = vunpack.c.l.b16 %v185
    %v1119 = vunpack.c.h.b16 %v185
    %v1120 = vunpack.c.l.b16 %v186
    %v1121 = vunpack.c.h.b16 %v186
    %v1122 = vunpack.c.l.b16 %v187
    %v1123 = vunpack.c.l.b16 %v188
    %v1124 = vunpack.c.h.b16 %v188
    %v1125 = vunpack.c.l.b16 %v189
    %v1126 = vunpack.c.h.b16 %v189
    %v1127 = vunpack.c.l.b16 %v190
    %v1128 = vunpack.c.h.b16 %v190
    %v1129 = vunpack.c.l.b16 %v191
    %v1130 = vunpack.c.l.b16 %v192
    %v1131 = vunpack.c.h.b16 %v192
    %v1132 = vunpack.c.l.b16 %v193
    %v1133 = vunpack.c.h.b16 %v193
    %v1134 = vunpack.c.l.b16 %v194
    %v1135 = vunpack.c.h.b16 %v194
    %v1136 = vunpack.c.l.b16 %v195
    %v1137 = vunpack.c.l.b16 %v196
    %v1138 = vunpack.c.h.b16 %v196
    %v1139 = vunpack.c.l.b16 %v197
    %v1140 = vunpack.c.h.b16 %v197
    %v1141 = vunpack.c.l.b16 %v198
    %v1142 = vunpack.c.h.b16 %v198
    %v1143 = vunpack.c.l.b16 %v199
    %v1144 = vunpack.c.l.b16 %v200
    %v1145 = vunpack.c.h.b16 %v200
    %v1146 = vunpack.c.l.b16 %v201
    %v1147 = vunpack.c.h.b16 %v201
    %v1148 = vunpack.c.l.b16 %v202
    %v1149 = vunpack.c.h.b16 %v202
    %v1150 = vunpack.c.l.b16 %v203
    %v1151 = vunpack.c.l.b16 %v204
    %v1152 = vunpack.c.h.b16 %v204
    %v1153 = vunpack.c.l.b16 %v205
    %v1154 = vunpack.c.h.b16 %v205
    %v1155 = vunpack.c.l.b16 %v206
    %v1156 = vunpack.c.h.b16 %v206
    %v1157 = vunpack.c.l.b16 %v207
    %v1158 = vunpack.c.l.b16 %v208
    %v1159 = vunpack.c.h.b16 %v208
    %v1160 = vunpack.c.l.b16 %v209
    %v1161 = vunpack.c.h.b16 %v209
    %v1162 = vunpack.c.l.b16 %v210
    %v1163 = vunpack.c.h.b16 %v210
    %v1164 = vunpack.c.l.b16 %v211
    %v1165 = vunpack.c.l.b16 %v212
    %v1166 = vunpack.c.h.b16 %v212
    %v1167 = vunpack.c.l.b16 %v213
    %v1168 = vunpack.c.h.b16 %v213
    %v1169 = vunpack.c.l.b16 %v214
    %v1170 = vunpack.c.h.b16 %v214
    %v1171 = vunpack.c.l.b16 %v215
    %v1172 = vunpack.c.l.b16 %v216
    %v1173 = vunpack.c.h.b16 %v216
    %v1174 = vunpack.c.l.b16 %v217
    %v1175 = vunpack.c.h.b16 %v217
    %v1176 = vunpack.c.l.b16 %v218
    %v1177 = vunpack.c.h.b16 %v218
    %v1178 = vunpack.c.l.b16 %v219
    %v1179 = vunpack.c.l.b16 %v220
    %v1180 = vunpack.c.h.b16 %v220
    %v1181 = vunpack.c.l.b16 %v221
    %v1182 = vunpack.c.h.b16 %v221
    %v1183 = vunpack.c.l.b16 %v222
    %v1184 = vunpack.c.h.b16 %v222
    %v1185 = vunpack.c.l.b16 %v223
    %v1186 = vunpack.c.l.b16 %v224
    %v1187 = vunpack.c.h.b16 %v224
    %v1188 = vunpack.c.l.b16 %v225
    %v1189 = vunpack.c.h.b16 %v225
    %v1190 = vunpack.c.l.b16 %v226
    %v1191 = vunpack.c.h.b16 %v226
    %v1192 = vunpack.c.l.b16 %v227
    %v1193 = vunpack.c.l.b16 %v228
    %v1194 = vunpack.c.h.b16 %v228
    %v1195 = vunpack.c.l.b16 %v229
    %v1196 = vunpack.c.h.b16 %v229
    %v1197 = vunpack.c.l.b16 %v230
    %v1198 = vunpack.c.h.b16 %v230
    %v1199 = vunpack.c.l.b16 %v231
    %v1200 = vunpack.c.l.b16 %v232
    %v1201 = vunpack.c.h.b16 %v232
    %v1202 = vunpack.c.l.b16 %v233
    %v1203 = vunpack.c.h.b16 %v233
    %v1204 = vunpack.c.l.b16 %v234
    %v1205 = vunpack.c.h.b16 %v234
    %v1206 = vunpack.c.l.b16 %v235
    %v1207 = vunpack.c.l.b16 %v236
    %v1208 = vunpack.c.h.b16 %v236
    %v1209 = vunpack.c.l.b16 %v237
    %v1210 = vunpack.c.h.b16 %v237
    %v1211 = vunpack.c.l.b16 %v238
    %v1212 = vunpack.c.h.b16 %v238
    %v1213 = vunpack.c.l.b16 %v239
    %v1214 = vunpack.c.l.b16 %v240
    %v1215 = vunpack.c.h.b16 %v240
    %v1216 = vunpack.c.l.b16 %v241
    %v1217 = vunpack.c.h.b16 %v241
    %v1218 = vunpack.c.l.b16 %v242
    %v1219 = vunpack.c.h.b16 %v242
    %v1220 = vunpack.c.l.b16 %v243
    %v1221 = vunpack.c.l.b16 %v244
    %v1222 = vunpack.c.h.b16 %v244
    %v1223 = vunpack.c.l.b16 %v245
    %v1224 = vunpack.c.h.b16 %v245
    %v1225 = vunpack.c.l.b16 %v246
    %v1226 = vunpack.c.h.b16 %v246
    %v1227 = vunpack.c.l.b16 %v247
    %v1228 = vunpack.c.l.b16 %v248
    %v1229 = vunpack.c.h.b16 %v248
    %v1230 = vunpack.c.l.b16 %v249
    %v1231 = vunpack.c.h.b16 %v249
    %v1232 = vunpack.c.l.b16 %v250
    %v1233 = vunpack.c.h.b16 %v250
    %v1234 = vunpack.c.l.b16 %v251
    %v1235 = vunpack.c.l.b16 %v252
    %v1236 = vunpack.c.h.b16 %v252
    %v1237 = vunpack.c.l.b16 %v253
    %v1238 = vunpack.c.h.b16 %v253
    %v1239 = vunpack.c.l.b16 %v254
    %v1240 = vunpack.c.h.b16 %v254
    %v1241 = vunpack.c.l.b16 %v255
    %v1242 = vunpack.c.l.b16 %v256
    %v1243 = vunpack.c.h.b16 %v256
    %v1244 = vunpack.c.l.b16 %v257
    %v1245 = vunpack.c.h.b16 %v257
    %v1246 = vunpack.c.l.b16 %v258
    %v1247 = vunpack.c.h.b16 %v258
    %v1248 = vunpack.c.l.b16 %v259
    %v1249 = vunpack.c.l.b16 %v260
    %v1250 = vunpack.c.h.b16 %v260
    %v1251 = vunpack.c.l.b16 %v261
    %v1252 = vunpack.c.h.b16 %v261
    %v1253 = vunpack.c.l.b16 %v262
    %v1254 = vunpack.c.h.b16 %v262
    %v1255 = vunpack.c.l.b16 %v263
    %v1256 = vunpack.c.l.b16 %v264
    %v1257 = vunpack.c.h.b16 %v264
    %v1258 = vunpack.c.l.b16 %v265
    %v1259 = vunpack.c.h.b16 %v265
    %v1260 = vunpack.c.l.b16 %v266
    %v1261 = vunpack.c.h.b16 %v266
    %v1262 = vunpack.c.l.b16 %v267
    %v1263 = vunpack.c.l.b16 %v268
    %v1264 = vunpack.c.h.b16 %v268
    %v1265 = vunpack.c.l.b16 %v269
    %v1266 = vunpack.c.h.b16 %v269
    %v1267 = vunpack.c.l.b16 %v270
    %v1268 = vunpack.c.h.b16 %v270
    %v1269 = vunpack.c.l.b16 %v271
    %v1270 = vunpack.c.l.b16 %v272
    %v1271 = vunpack.c.h.b16 %v272
    %v1272 = vunpack.c.l.b16 %v273
    %v1273 = vunpack.c.h.b16 %v273
    %v1274 = vunpack.c.l.b16 %v274
    %v1275 = vunpack.c.h.b16 %v274
    %v1276 = vunpack.c.l.b16 %v275
    %v1277 = vunpack.c.l.b16 %v276
    %v1278 = vunpack.c.h.b16 %v276
    %v1279 = vunpack.c.l.b16 %v277
    %v1280 = vunpack.c.h.b16 %v277
    %v1281 = vunpack.c.l.b16 %v278
    %v1282 = vunpack.c.h.b16 %v278
    %v1283 = vunpack.c.l.b16 %v279
    %v1284 = vunpack.c.l.b16 %v280
    %v1285 = vunpack.c.h.b16 %v280
    %v1286 = vunpack.c.l.b16 %v281
    %v1287 = vunpack.c.h.b16 %v281
    %v1288 = vunpack.c.l.b16 %v282
    %v1289 = vunpack.c.h.b16 %v282
    %v1290 = vunpack.c.l.b16 %v283
    %v1291 = vunpack.c.l.b16 %v284
    %v1292 = vunpack.c.h.b16 %v284
    %v1293 = vunpack.c.l.b16 %v285
    %v1294 = vunpack.c.h.b16 %v285
    %v1295 = vunpack.c.l.b16 %v286
    %v1296 = vunpack.c.h.b16 %v286
    %v1297 = vunpack.c.l.b16 %v287
    %v1298 = vunpack.c.l.b16 %v288
    %v1299 = vunpack.c.h.b16 %v288
    %v1300 = vunpack.c.l.b16 %v289
    %v1301 = vunpack.c.h.b16 %v289
    %v1302 = vunpack.c.l.b16 %v290
    %v1303 = vunpack.c.h.b16 %v290
    %v1304 = vunpack.c.l.b16 %v291
    %v1305 = vunpack.c.l.b16 %v292
    %v1306 = vunpack.c.h.b16 %v292
    %v1307 = vunpack.c.l.b16 %v293
    %v1308 = vunpack.c.h.b16 %v293
    %v1309 = vunpack.c.l.b16 %v294
    %v1310 = vunpack.c.h.b16 %v294
    %v1311 = vunpack.c.l.b16 %v295
    %v1312 = vunpack.c.l.b16 %v296
    %v1313 = vunpack.c.h.b16 %v296
    %v1314 = vunpack.c.l.b16 %v297
    %v1315 = vunpack.c.h.b16 %v297
    %v1316 = vunpack.c.l.b16 %v298
    %v1317 = vunpack.c.h.b16 %v298
    %v1318 = vunpack.c.l.b16 %v299
    %v1319 = vunpack.c.l.b16 %v300
    %v1320 = vunpack.c.h.b16 %v300
    %v1321 = vunpack.c.l.b16 %v301
    %v1322 = vunpack.c.h.b16 %v301
    %v1323 = vunpack.c.l.b16 %v302
    %v1324 = vunpack.c.h.b16 %v302
    %v1325 = vunpack.c.l.b16 %v303
    %v1326 = vunpack.c.l.b16 %v304
    %v1327 = vunpack.c.h.b16 %v304
    %v1328 = vunpack.c.l.b16 %v305
    %v1329 = vunpack.c.h.b16 %v305
    %v1330 = vunpack.c.l.b16 %v306
    %v1331 = vunpack.c.h.b16 %v306
    %v1332 = vunpack.c.l.b16 %v307
    %v1333 = vunpack.c.l.b16 %v308
    %v1334 = vunpack.c.h.b16 %v308
    %v1335 = vunpack.c.l.b16 %v309
    %v1336 = vunpack.c.h.b16 %v309
    %v1337 = vunpack.c.l.b16 %v310
    %v1338 = vunpack.c.h.b16 %v310
    %v1339 = vunpack.c.l.b16 %v311
    %v1340 = vunpack.c.l.b16 %v312
    %v1341 = vunpack.c.h.b16 %v312
    %v1342 = vunpack.c.l.b16 %v313
    %v1343 = vunpack.c.h.b16 %v313
    %v1344 = vunpack.c.l.b16 %v314
    %v1345 = vunpack.c.h.b16 %v314
    %v1346 = vunpack.c.l.b16 %v315
    %v1347 = vunpack.c.l.b16 %v316
    %v1348 = vunpack.c.h.b16 %v316
    %v1349 = vunpack.c.l.b16 %v317
    %v1350 = vunpack.c.h.b16 %v317
    %v1351 = vunpack.c.l.b16 %v318
    %v1352 = vunpack.c.h.b16 %v318
    %v1353 = vunpack.c.l.b16 %v319
    %v1354 = vunpack.c.l.b16 %v320
    %v1355 = vunpack.c.h.b16 %v320
    %v1356 = vunpack.c.l.b16 %v321
    %v1357 = vunpack.c.h.b16 %v321
    %v1358 = vunpack.c.l.b16 %v322
    %v1359 = vunpack.c.h.b16 %v322
    %v1360 = vunpack.c.l.b16 %v323
    %v1361 = vunpack.c.l.b16 %v324
    %v1362 = vunpack.c.h.b16 %v324
    %v1363 = vunpack.c.l.b16 %v325
    %v1364 = vunpack.c.h.b16 %v325
    %v1365 = vunpack.c.l.b16 %v326
    %v1366 = vunpack.c.h.b16 %v326
    %v1367 = vunpack.c.l.b16 %v327
    %v1368 = vunpack.c.l.b16 %v328
    %v1369 = vunpack.c.h.b16 %v328
    %v1370 = vunpack.c.l.b16 %v329
    %v1371 = vunpack.c.h.b16 %v329
    %v1372 = vunpack.c.l.b16 %v330
    %v1373 = vunpack.c.h.b16 %v330
    %v1374 = vunpack.c.l.b16 %v331
    %v1375 = vunpack.c.l.b16 %v332
    %v1376 = vunpack.c.h.b16 %v332
    %v1377 = vunpack.c.l.b16 %v333
    %v1378 = vunpack.c.h.b16 %v333
    %v1379 = vunpack.c.l.b16 %v334
    %v1380 = vunpack.c.h.b16 %v334
    %v1381 = vunpack.c.l.b16 %v335
    %v1382 = vunpack.c.l.b16 %v336
    %v1383 = vunpack.c.h.b16 %v336
    %v1384 = vunpack.c.l.b16 %v337
    %v1385 = vunpack.c.h.b16 %v337
    %v1386 = vunpack.c.l.b16 %v338
    %v1387 = vunpack.c.h.b16 %v338
    %v1388 = vunpack.c.l.b16 %v339
    %v1389 = vunpack.c.l.b16 %v340
    %v1390 = vunpack.c.h.b16 %v340
    %v1391 = vunpack.c.l.b16 %v341
    %v1392 = vunpack.c.h.b16 %v341
    %v1393 = vunpack.c.l.b16 %v342
    %v1394 = vunpack.c.h.b16 %v342
    %v1395 = vunpack.c.l.b16 %v343
    %v1396 = vunpack.c.l.b16 %v344
    %v1397 = vunpack.c.h.b16 %v344
    %v1398 = vunpack.c.l.b16 %v345
    %v1399 = vunpack.c.h.b16 %v345
    %v1400 = vunpack.c.l.b16 %v346
    %v1401 = vunpack.c.h.b16 %v346
    %v1402 = vunpack.c.l.b16 %v347
    %v1403 = vunpack.c.l.b16 %v348
    %v1404 = vunpack.c.h.b16 %v348
    %v1405 = vunpack.c.l.b16 %v349
    %v1406 = vunpack.c.h.b16 %v349
    %v1407 = vunpack.c.l.b16 %v350
    %v1408 = vunpack.c.h.b16 %v350
    %v1409 = vunpack.c.l.b16 %v351
    %v1410 = vunpack.c.l.b16 %v352
    %v1411 = vunpack.c.h.b16 %v352
    %v1412 = vunpack.c.l.b16 %v353
    %v1413 = vunpack.c.h.b16 %v353
    %v1414 = vunpack.c.l.b16 %v354
    %v1415 = vunpack.c.h.b16 %v354
    %v1416 = vunpack.c.l.b16 %v355
    %v1417 = vunpack.c.l.b16 %v356
    %v1418 = vunpack.c.h.b16 %v356
    %v1419 = vunpack.c.l.b16 %v357
    %v1420 = vunpack.c.h.b16 %v357
    %v1421 = vunpack.c.l.b16 %v358
    %v1422 = vunpack.c.h.b16 %v358
    %v1423 = vunpack.c.l.b16 %v359
    %v1424 = vunpack.c.l.b16 %v360
    %v1425 = vunpack.c.h.b16 %v360
    %v1426 = vunpack.c.l.b16 %v361
    %v1427 = vunpack.c.h.b16 %v361
    %v1428 = vunpack.c.l.b16 %v362
    %v1429 = vunpack.c.h.b16 %v362
    %v1430 = vunpack.c.l.b16 %v363
    %v1431 = vunpack.c.l.b16 %v364
    %v1432 = vunpack.c.h.b16 %v364
    %v1433 = vunpack.c.l.b16 %v365
    %v1434 = vunpack.c.h.b16 %v365
    %v1435 = vunpack.c.l.b16 %v366
    %v1436 = vunpack.c.h.b16 %v366
    %v1437 = vunpack.c.l.b16 %v367
    %v1438 = vunpack.c.l.b16 %v368
    %v1439 = vunpack.c.h.b16 %v368
    %v1440 = vunpack.c.l.b16 %v369
    %v1441 = vunpack.c.h.b16 %v369
    %v1442 = vunpack.c.l.b16 %v370
    %v1443 = vunpack.c.h.b16 %v370
    %v1444 = vunpack.c.l.b16 %v371
    %v1445 = vunpack.c.l.b16 %v372
    %v1446 = vunpack.c.h.b16 %v372
    %v1447 = vunpack.c.l.b16 %v373
    %v1448 = vunpack.c.h.b16 %v373
    %v1449 = vunpack.c.l.b16 %v374
    %v1450 = vunpack.c.h.b16 %v374
    %v1451 = vunpack.c.l.b16 %v375
    %v1452 = vunpack.c.l.b16 %v376
    %v1453 = vunpack.c.h.b16 %v376
    %v1454 = vunpack.c.l.b16 %v377
    %v1455 = vunpack.c.h.b16 %v377
    %v1456 = vunpack.c.l.b16 %v378
    %v1457 = vunpack.c.h.b16 %v378
    %v1458 = vunpack.c.l.b16 %v379
    %v1459 = vunpack.c.l.b16 %v380
    %v1460 = vunpack.c.h.b16 %v380
    %v1461 = vunpack.c.l.b16 %v381
    %v1462 = vunpack.c.h.b16 %v381
    %v1463 = vunpack.c.l.b16 %v382
    %v1464 = vunpack.c.h.b16 %v382
    %v1465 = vunpack.c.l.b16 %v383
    %v1466 = vunpack.c.l.b16 %v384
    %v1467 = vunpack.c.h.b16 %v384
    %v1468 = vunpack.c.l.b16 %v385
    %v1469 = vunpack.c.h.b16 %v385
    %v1470 = vunpack.c.l.b16 %v386
    %v1471 = vunpack.c.h.b16 %v386
    %v1472 = vunpack.c.l.b16 %v387
    %v1473 = vunpack.c.l.b16 %v388
    %v1474 = vunpack.c.h.b16 %v388
    %v1475 = vunpack.c.l.b16 %v389
    %v1476 = vunpack.c.h.b16 %v389
    %v1477 = vunpack.c.l.b16 %v390
    %v1478 = vunpack.c.h.b16 %v390
    %v1479 = vunpack.c.l.b16 %v391
    %v1480 = vunpack.c.l.b16 %v392
    %v1481 = vunpack.c.h.b16 %v392
    %v1482 = vunpack.c.l.b16 %v393
    %v1483 = vunpack.c.h.b16 %v393
    %v1484 = vunpack.c.l.b16 %v394
    %v1485 = vunpack.c.h.b16 %v394
    %v1486 = vunpack.c.l.b16 %v395
    %v1487 = vunpack.c.l.b16 %v396
    %v1488 = vunpack.c.h.b16 %v396
    %v1489 = vunpack.c.l.b16 %v397
    %v1490 = vunpack.c.h.b16 %v397
    %v1491 = vunpack.c.l.b16 %v398
    %v1492 = vunpack.c.h.b16 %v398
    %v1493 = vunpack.c.l.b16 %v399
    %v1494 = vunpack.c.l.b16 %v400
    %v1495 = vunpack.c.h.b16 %v400
    %v1496 = vunpack.c.l.b16 %v401
    %v1497 = vunpack.c.h.b16 %v401
    %v1498 = vunpack.c.l.b16 %v402
    %v1499 = vunpack.c.h.b16 %v402
    %v1500 = vunpack.c.l.b16 %v403
    %v1501 = vunpack.c.l.b16 %v404
    %v1502 = vunpack.c.h.b16 %v404
    %v1503 = vunpack.c.l.b16 %v405
    %v1504 = vunpack.c.h.b16 %v405
    %v1505 = vunpack.c.l.b16 %v406
    %v1506 = vunpack.c.h.b16 %v406
    %v1507 = vunpack.c.l.b16 %v407
    %v1508 = vunpack.c.l.b16 %v408
    %v1509 = vunpack.c.h.b16 %v408
    %v1510 = vunpack.c.l.b16 %v409
    %v1511 = vunpack.c.h.b16 %v409
    %v1512 = vunpack.c.l.b16 %v410
    %v1513 = vunpack.c.h.b16 %v410
    %v1514 = vunpack.c.l.b16 %v411
    %v1515 = vunpack.c.l.b16 %v412
    %v1516 = vunpack.c.h.b16 %v412
    %v1517 = vunpack.c.l.b16 %v413
    %v1518 = vunpack.c.h.b16 %v413
    %v1519 = vunpack.c.l.b16 %v414
    %v1520 = vunpack.c.h.b16 %v414
    %v1521 = vunpack.c.l.b16 %v415
    %v1522 = vunpack.c.l.b16 %v416
    %v1523 = vunpack.c.h.b16 %v416
    %v1524 = vunpack.c.l.b16 %v417
    %v1525 = vunpack.c.h.b16 %v417
    %v1526 = vunpack.c.l.b16 %v418
    %v1527 = vunpack.c.h.b16 %v418
    %v1528 = vunpack.c.l.b16 %v419
    %v1529 = vunpack.c.l.b16 %v420
    %v1530 = vunpack.c.h.b16 %v420
    %v1531 = vunpack.c.l.b16 %v421
    %v1532 = vunpack.c.h.b16 %v421
    %v1533 = vunpack.c.l.b16 %v422
    %v1534 = vunpack.c.h.b16 %v422
    %v1535 = vunpack.c.l.b16 %v423
    %v1536 = vunpack.c.l.b16 %v424
    %v1537 = vunpack.c.h.b16 %v424
    %v1538 = vunpack.c.l.b16 %v425
    %v1539 = vunpack.c.h.b16 %v425
    %v1540 = vunpack.c.l.b16 %v426
    %v1541 = vunpack.c.h.b16 %v426
    %v1542 = vunpack.c.l.b16 %v427
    %v1543 = vpack.c.b16 %v864, %v857
    %v1544 = vpack.c.b16 %v865, %v858
    %v1545 = vpack.c.b16 %v866, %v859
    %v1546 = vpack.c.b16 %v867, %v860
    %v1547 = vpack.c.b16 %v868, %v861
    %v1548 = vpack.c.b16 %v869, %v862
    %v1549 = vpack.c.b16 %v870, %v863
    %v1550 = vpack.c.b16 %v878, %v871
    %v1551 = vpack.c.b16 %v879, %v872
    %v1552 = vpack.c.b16 %v880, %v873
    %v1553 = vpack.c.b16 %v881, %v874
    %v1554 = vpack.c.b16 %v882, %v875
    %v1555 = vpack.c.b16 %v883, %v876
    %v1556 = vpack.c.b16 %v884, %v877
    %v1557 = vpack.c.b16 %v892, %v885
    %v1558 = vpack.c.b16 %v893, %v886
    %v1559 = vpack.c.b16 %v894, %v887
    %v1560 = vpack.c.b16 %v895, %v888
    %v1561 = vpack.c.b16 %v896, %v889
    %v1562 = vpack.c.b16 %v897, %v890
    %v1563 = vpack.c.b16 %v898, %v891
    %v1564 = vpack.c.b16 %v906, %v899
    %v1565 = vpack.c.b16 %v907, %v900
    %v1566 = vpack.c.b16 %v908, %v901
    %v1567 = vpack.c.b16 %v909, %v902
    %v1568 = vpack.c.b16 %v910, %v903
    %v1569 = vpack.c.b16 %v911, %v904
    %v1570 = vpack.c.b16 %v912, %v905
    %v1571 = vpack.c.b16 %v920, %v913
    %v1572 = vpack.c.b16 %v921, %v914
    %v1573 = vpack.c.b16 %v922, %v915
    %v1574 = vpack.c.b16 %v923, %v916
    %v1575 = vpack.c.b16 %v924, %v917
    %v1576 = vpack.c.b16 %v925, %v918
    %v1577 = vpack.c.b16 %v926, %v919
    %v1578 = vpack.c.b16 %v934, %v927
    %v1579 = vpack.c.b16 %v935, %v928
    %v1580 = vpack.c.b16 %v936, %v929
    %v1581 = vpack.c.b16 %v937, %v930
    %v1582 = vpack.c.b16 %v938, %v931
    %v1583 = vpack.c.b16 %v939, %v932
    %v1584 = vpack.c.b16 %v940, %v933
    %v1585 = vpack.c.b16 %v948, %v941
    %v1586 = vpack.c.b16 %v949, %v942
    %v1587 = vpack.c.b16 %v950, %v943
    %v1588 = vpack.c.b16 %v951, %v944
    %v1589 = vpack.c.b16 %v952, %v945
    %v1590 = vpack.c.b16 %v953, %v946
    %v1591 = vpack.c.b16 %v954, %v947
    %v1592 = vpack.c.b16 %v962, %v955
    %v1593 = vpack.c.b16 %v963, %v956
    %v1594 = vpack.c.b16 %v964, %v957
    %v1595 = vpack.c.b16 %v965, %v958
    %v1596 = vpack.c.b16 %v966, %v959
    %v1597 = vpack.c.b16 %v967, %v960
    %v1598 = vpack.c.b16 %v968, %v961
    %v1599 = vpack.c.b16 %v976, %v969
    %v1600 = vpack.c.b16 %v977, %v970
    %v1601 = vpack.c.b16 %v978, %v971
    %v1602 = vpack.c.b16 %v979, %v972
    %v1603 = vpack.c.b16 %v980, %v973
    %v1604 = vpack.c.b16 %v981, %v974
    %v1605 = vpack.c.b16 %v982, %v975
    %v1606 = vpack.c.b16 %v990, %v983
    %v1607 = vpack.c.b16 %v991, %v984
    %v1608 = vpack.c.b16 %v992, %v985
    %v1609 = vpack.c.b16 %v993, %v986
    %v1610 = vpack.c.b16 %v994, %v987
    %v1611 = vpack.c.b16 %v995, %v988
    %v1612 = vpack.c.b16 %v996, %v989
    %v1613 = vpack.c.b16 %v1004, %v997
    %v1614 = vpack.c.b16 %v1005, %v998
    %v1615 = vpack.c.b16 %v1006, %v999
    %v1616 = vpack.c.b16 %v1007, %v1000
    %v1617 = vpack.c.b16 %v1008, %v1001
    %v1618 = vpack.c.b16 %v1009, %v1002
    %v1619 = vpack.c.b16 %v1010, %v1003
    %v1620 = vpack.c.b16 %v1018, %v1011
    %v1621 = vpack.c.b16 %v1019, %v1012
    %v1622 = vpack.c.b16 %v1020, %v1013
    %v1623 = vpack.c.b16 %v1021, %v1014
    %v1624 = vpack.c.b16 %v1022, %v1015
    %v1625 = vpack.c.b16 %v1023, %v1016
    %v1626 = vpack.c.b16 %v1024, %v1017
    %v1627 = vpack.c.b16 %v1032, %v1025
    %v1628 = vpack.c.b16 %v1033, %v1026
    %v1629 = vpack.c.b16 %v1034, %v1027
    %v1630 = vpack.c.b16 %v1035, %v1028
    %v1631 = vpack.c.b16 %v1036, %v1029
    %v1632 = vpack.c.b16 %v1037, %v1030
    %v1633 = vpack.c.b16 %v1038, %v1031
    %v1634 = vpack.c.b16 %v1046, %v1039
    %v1635 = vpack.c.b16 %v1047, %v1040
    %v1636 = vpack.c.b16 %v1048, %v1041
    %v1637 = vpack.c.b16 %v1049, %v1042
    %v1638 = vpack.c.b16 %v1050, %v1043
    %v1639 = vpack.c.b16 %v1051, %v1044
    %v1640 = vpack.c.b16 %v1052, %v1045
    %v1641 = vpack.c.b16 %v1060, %v1053
    %v1642 = vpack.c.b16 %v1061, %v1054
    %v1643 = vpack.c.b16 %v1062, %v1055
    %v1644 = vpack.c.b16 %v1063, %v1056
    %v1645 = vpack.c.b16 %v1064, %v1057
    %v1646 = vpack.c.b16 %v1065, %v1058
    %v1647 = vpack.c.b16 %v1066, %v1059
    %v1648 = vpack.c.b16 %v1074, %v1067
    %v1649 = vpack.c.b16 %v1075, %v1068
    %v1650 = vpack.c.b16 %v1076, %v1069
    %v1651 = vpack.c.b16 %v1077, %v1070
    %v1652 = vpack.c.b16 %v1078, %v1071
    %v1653 = vpack.c.b16 %v1079, %v1072
    %v1654 = vpack.c.b16 %v1080, %v1073
    %v1655 = vpack.c.b16 %v1088, %v1081
    %v1656 = vpack.c.b16 %v1089, %v1082
    %v1657 = vpack.c.b16 %v1090, %v1083
    %v1658 = vpack.c.b16 %v1091, %v1084
    %v1659 = vpack.c.b16 %v1092, %v1085
    %v1660 = vpack.c.b16 %v1093, %v1086
    %v1661 = vpack.c.b16 %v1094, %v1087
    %v1662 = vpack.c.b16 %v1102, %v1095
    %v1663 = vpack.c.b16 %v1103, %v1096
    %v1664 = vpack.c.b16 %v1104, %v1097
    %v1665 = vpack.c.b16 %v1105, %v1098
    %v1666 = vpack.c.b16 %v1106, %v1099
    %v1667 = vpack.c.b16 %v1107, %v1100
    %v1668 = vpack.c.b16 %v1108, %v1101
    %v1669 = vpack.c.b16 %v1116, %v1109
    %v1670 = vpack.c.b16 %v1117, %v1110
    %v1671 = vpack.c.b16 %v1118, %v1111
    %v1672 = vpack.c.b16 %v1119, %v1112
    %v1673 = vpack.c.b16 %v1120, %v1113
    %v1674 = vpack.c.b16 %v1121, %v1114
    %v1675 = vpack.c.b16 %v1122, %v1115
    %v1676 = vpack.c.b16 %v1130, %v1123
    %v1677 = vpack.c.b16 %v1131, %v1124
    %v1678 = vpack.c.b16 %v1132, %v1125
    %v1679 = vpack.c.b16 %v1133, %v1126
    %v1680 = vpack.c.b16 %v1134, %v1127
    %v1681 = vpack.c.b16 %v1135, %v1128
    %v1682 = vpack.c.b16 %v1136, %v1129
    %v1683 = vpack.c.b16 %v1144, %v1137
    %v1684 = vpack.c.b16 %v1145, %v1138
    %v1685 = vpack.c.b16 %v1146, %v1139
    %v1686 = vpack.c.b16 %v1147, %v1140
    %v1687 = vpack.c.b16 %v1148, %v1141
    %v1688 = vpack.c.b16 %v1149, %v1142
    %v1689 = vpack.c.b16 %v1150, %v1143
    %v1690 = vpack.c.b16 %v1158, %v1151
    %v1691 = vpack.c.b16 %v1159, %v1152
    %v1692 = vpack.c.b16 %v1160, %v1153
    %v1693 = vpack.c.b16 %v1161, %v1154
    %v1694 = vpack.c.b16 %v1162, %v1155
    %v1695 = vpack.c.b16 %v1163, %v1156
    %v1696 = vpack.c.b16 %v1164, %v1157
    %v1697 = vpack.c.b16 %v1172, %v1165
    %v1698 = vpack.c.b16 %v1173, %v1166
    %v1699 = vpack.c.b16 %v1174, %v1167
    %v1700 = vpack.c.b16 %v1175, %v1168
    %v1701 = vpack.c.b16 %v1176, %v1169
    %v1702 = vpack.c.b16 %v1177, %v1170
    %v1703 = vpack.c.b16 %v1178, %v1171
    %v1704 = vpack.c.b16 %v1186, %v1179
    %v1705 = vpack.c.b16 %v1187, %v1180
    %v1706 = vpack.c.b16 %v1188, %v1181
    %v1707 = vpack.c.b16 %v1189, %v1182
    %v1708 = vpack.c.b16 %v1190, %v1183
    %v1709 = vpack.c.b16 %v1191, %v1184
    %v1710 = vpack.c.b16 %v1192, %v1185
    %v1711 = vpack.c.b16 %v1200, %v1193
    %v1712 = vpack.c.b16 %v1201, %v1194
    %v1713 = vpack.c.b16 %v1202, %v1195
    %v1714 = vpack.c.b16 %v1203, %v1196
    %v1715 = vpack.c.b16 %v1204, %v1197
    %v1716 = vpack.c.b16 %v1205, %v1198
    %v1717 = vpack.c.b16 %v1206, %v1199
    %v1718 = vpack.c.b16 %v1214, %v1207
    %v1719 = vpack.c.b16 %v1215, %v1208
    %v1720 = vpack.c.b16 %v1216, %v1209
    %v1721 = vpack.c.b16 %v1217, %v1210
    %v1722 = vpack.c.b16 %v1218, %v1211
    %v1723 = vpack.c.b16 %v1219, %v1212
    %v1724 = vpack.c.b16 %v1220, %v1213
    %v1725 = vpack.c.b16 %v1228, %v1221
    %v1726 = vpack.c.b16 %v1229, %v1222
    %v1727 = vpack.c.b16 %v1230, %v1223
    %v1728 = vpack.c.b16 %v1231, %v1224
    %v1729 = vpack.c.b16 %v1232, %v1225
    %v1730 = vpack.c.b16 %v1233, %v1226
    %v1731 = vpack.c.b16 %v1234, %v1227
    %v1732 = vpack.c.b16 %v1242, %v1235
    %v1733 = vpack.c.b16 %v1243, %v1236
    %v1734 = vpack.c.b16 %v1244, %v1237
    %v1735 = vpack.c.b16 %v1245, %v1238
    %v1736 = vpack.c.b16 %v1246, %v1239
    %v1737 = vpack.c.b16 %v1247, %v1240
    %v1738 = vpack.c.b16 %v1248, %v1241
    %v1739 = vpack.c.b16 %v1256, %v1249
    %v1740 = vpack.c.b16 %v1257, %v1250
    %v1741 = vpack.c.b16 %v1258, %v1251
    %v1742 = vpack.c.b16 %v1259, %v1252
    %v1743 = vpack.c.b16 %v1260, %v1253
    %v1744 = vpack.c.b16 %v1261, %v1254
    %v1745 = vpack.c.b16 %v1262, %v1255
    %v1746 = vpack.c.b16 %v1270, %v1263
    %v1747 = vpack.c.b16 %v1271, %v1264
    %v1748 = vpack.c.b16 %v1272, %v1265
    %v1749 = vpack.c.b16 %v1273, %v1266
    %v1750 = vpack.c.b16 %v1274, %v1267
    %v1751 = vpack.c.b16 %v1275, %v1268
    %v1752 = vpack.c.b16 %v1276, %v1269
    %v1753 = vpack.c.b16 %v1284, %v1277
    %v1754 = vpack.c.b16 %v1285, %v1278
    %v1755 = vpack.c.b16 %v1286, %v1279
    %v1756 = vpack.c.b16 %v1287, %v1280
    %v1757 = vpack.c.b16 %v1288, %v1281
    %v1758 = vpack.c.b16 %v1289, %v1282
    %v1759 = vpack.c.b16 %v1290, %v1283
    %v1760 = vpack.c.b16 %v1298, %v1291
    %v1761 = vpack.c.b16 %v1299, %v1292
    %v1762 = vpack.c.b16 %v1300, %v1293
    %v1763 = vpack.c.b16 %v1301, %v1294
    %v1764 = vpack.c.b16 %v1302, %v1295
    %v1765 = vpack.c.b16 %v1303, %v1296
    %v1766 = vpack.c.b16 %v1304, %v1297
    %v1767 = vpack.c.b16 %v1312, %v1305
    %v1768 = vpack.c.b16 %v1313, %v1306
    %v1769 = vpack.c.b16 %v1314, %v1307
    %v1770 = vpack.c.b16 %v1315, %v1308
    %v1771 = vpack.c.b16 %v1316, %v1309
    %v1772 = vpack.c.b16 %v1317, %v1310
    %v1773 = vpack.c.b16 %v1318, %v1311
    %v1774 = vpack.c.b16 %v1326, %v1319
    %v1775 = vpack.c.b16 %v1327, %v1320
    %v1776 = vpack.c.b16 %v1328, %v1321
    %v1777 = vpack.c.b16 %v1329, %v1322
    %v1778 = vpack.c.b16 %v1330, %v1323
    %v1779 = vpack.c.b16 %v1331, %v1324
    %v1780 = vpack.c.b16 %v1332, %v1325
    %v1781 = vpack.c.b16 %v1340, %v1333
    %v1782 = vpack.c.b16 %v1341, %v1334
    %v1783 = vpack.c.b16 %v1342, %v1335
    %v1784 = vpack.c.b16 %v1343, %v1336
    %v1785 = vpack.c.b16 %v1344, %v1337
    %v1786 = vpack.c.b16 %v1345, %v1338
    %v1787 = vpack.c.b16 %v1346, %v1339
    %v1788 = vpack.c.b16 %v1354, %v1347
    %v1789 = vpack.c.b16 %v1355, %v1348
    %v1790 = vpack.c.b16 %v1356, %v1349
    %v1791 = vpack.c.b16 %v1357, %v1350
    %v1792 = vpack.c.b16 %v1358, %v1351
    %v1793 = vpack.c.b16 %v1359, %v1352
    %v1794 = vpack.c.b16 %v1360, %v1353
    %v1795 = vpack.c.b16 %v1368, %v1361
    %v1796 = vpack.c.b16 %v1369, %v1362
    %v1797 = vpack.c.b16 %v1370, %v1363
    %v1798 = vpack.c.b16 %v1371, %v1364
    %v1799 = vpack.c.b16 %v1372, %v1365
    %v1800 = vpack.c.b16 %v1373, %v1366
    %v1801 = vpack.c.b16 %v1374, %v1367
    %v1802 = vpack.c.b16 %v1382, %v1375
    %v1803 = vpack.c.b16 %v1383, %v1376
    %v1804 = vpack.c.b16 %v1384, %v1377
    %v1805 = vpack.c.b16 %v1385, %v1378
    %v1806 = vpack.c.b16 %v1386, %v1379
    %v1807 = vpack.c.b16 %v1387, %v1380
    %v1808 = vpack.c.b16 %v1388, %v1381
    %v1809 = vpack.c.b16 %v1396, %v1389
    %v1810 = vpack.c.b16 %v1397, %v1390
    %v1811 = vpack.c.b16 %v1398, %v1391
    %v1812 = vpack.c.b16 %v1399, %v1392
    %v1813 = vpack.c.b16 %v1400, %v1393
    %v1814 = vpack.c.b16 %v1401, %v1394
    %v1815 = vpack.c.b16 %v1402, %v1395
    %v1816 = vpack.c.b16 %v1410, %v1403
    %v1817 = vpack.c.b16 %v1411, %v1404
    %v1818 = vpack.c.b16 %v1412, %v1405
    %v1819 = vpack.c.b16 %v1413, %v1406
    %v1820 = vpack.c.b16 %v1414, %v1407
    %v1821 = vpack.c.b16 %v1415, %v1408
    %v1822 = vpack.c.b16 %v1416, %v1409
    %v1823 = vpack.c.b16 %v1424, %v1417
    %v1824 = vpack.c.b16 %v1425, %v1418
    %v1825 = vpack.c.b16 %v1426, %v1419
    %v1826 = vpack.c.b16 %v1427, %v1420
    %v1827 = vpack.c.b16 %v1428, %v1421
    %v1828 = vpack.c.b16 %v1429, %v1422
    %v1829 = vpack.c.b16 %v1430, %v1423
    %v1830 = vpack.c.b16 %v1438, %v1431
    %v1831 = vpack.c.b16 %v1439, %v1432
    %v1832 = vpack.c.b16 %v1440, %v1433
    %v1833 = vpack.c.b16 %v1441, %v1434
    %v1834 = vpack.c.b16 %v1442, %v1435
    %v1835 = vpack.c.b16 %v1443, %v1436
    %v1836 = vpack.c.b16 %v1444, %v1437
    %v1837 = vpack.c.b16 %v1452, %v1445
    %v1838 = vpack.c.b16 %v1453, %v1446
    %v1839 = vpack.c.b16 %v1454, %v1447
    %v1840 = vpack.c.b16 %v1455, %v1448
    %v1841 = vpack.c.b16 %v1456, %v1449
    %v1842 = vpack.c.b16 %v1457, %v1450
    %v1843 = vpack.c.b16 %v1458, %v1451
    %v1844 = vpack.c.b16 %v1466, %v1459
    %v1845 = vpack.c.b16 %v1467, %v1460
    %v1846 = vpack.c.b16 %v1468, %v1461
    %v1847 = vpack.c.b16 %v1469, %v1462
    %v1848 = vpack.c.b16 %v1470, %v1463
    %v1849 = vpack.c.b16 %v1471, %v1464
    %v1850 = vpack.c.b16 %v1472, %v1465
    %v1851 = vpack.c.b16 %v1480, %v1473
    %v1852 = vpack.c.b16 %v1481, %v1474
    %v1853 = vpack.c.b16 %v1482, %v1475
    %v1854 = vpack.c.b16 %v1483, %v1476
    %v1855 = vpack.c.b16 %v1484, %v1477
    %v1856 = vpack.c.b16 %v1485, %v1478
    %v1857 = vpack.c.b16 %v1486, %v1479
    %v1858 = vpack.c.b16 %v1494, %v1487
    %v1859 = vpack.c.b16 %v1495, %v1488
    %v1860 = vpack.c.b16 %v1496, %v1489
    %v1861 = vpack.c.b16 %v1497, %v1490
    %v1862 = vpack.c.b16 %v1498, %v1491
    %v1863 = vpack.c.b16 %v1499, %v1492
    %v1864 = vpack.c.b16 %v1500, %v1493
    %v1865 = vpack.c.b16 %v1508, %v1501
    %v1866 = vpack.c.b16 %v1509, %v1502
    %v1867 = vpack.c.b16 %v1510, %v1503
    %v1868 = vpack.c.b16 %v1511, %v1504
    %v1869 = vpack.c.b16 %v1512, %v1505
    %v1870 = vpack.c.b16 %v1513, %v1506
    %v1871 = vpack.c.b16 %v1514, %v1507
    %v1872 = vpack.c.b16 %v1522, %v1515
    %v1873 = vpack.c.b16 %v1523, %v1516
    %v1874 = vpack.c.b16 %v1524, %v1517
    %v1875 = vpack.c.b16 %v1525, %v1518
    %v1876 = vpack.c.b16 %v1526, %v1519
    %v1877 = vpack.c.b16 %v1527, %v1520
    %v1878 = vpack.c.b16 %v1528, %v1521
    %v1879 = vpack.c.b16 %v1536, %v1529
    %v1880 = vpack.c.b16 %v1537, %v1530
    %v1881 = vpack.c.b16 %v1538, %v1531
    %v1882 = vpack.c.b16 %v1539, %v1532
    %v1883 = vpack.c.b16 %v1540, %v1533
    %v1884 = vpack.c.b16 %v1541, %v1534
    %v1885 = vpack.c.b16 %v1542, %v1535
    %vm2229 = vcmask 130048
    %v2231 = vsel %vm2229, %v35, 0
    %2233 = vmatprep.subr.bf16.mxu0 %v1593
    %2234 = vmatpush1.bf16.msra.mxu0 %v1592
    %2235 = vmatprep.subr.bf16.mxu0 %v1586
    %2236 = vmatpush1.bf16.msra.mxu0 %v1585
    %2237 = vmatprep.subr.bf16.mxu0 %v1579
    %2238 = vmatpush1.bf16.msra.mxu0 %v1578
    %2239 = vmatprep.subr.bf16.mxu0 %v1572
    %2240 = vmatpush1.bf16.msra.mxu0 %v1571
    %2241 = vmatprep.subr.bf16.mxu0 %v1565
    %2242 = vmatpush1.bf16.msra.mxu0 %v1564
    %2243 = vmatprep.subr.bf16.mxu0 %v1558
    %2244 = vmatpush1.bf16.msra.mxu0 %v1557
    %2245 = vmatprep.subr.bf16.mxu0 %v1551
    %2246 = vmatpush1.bf16.msra.mxu0 %v1550
    %2247 = vmatprep.subr.bf16.mxu0 %v1544
    %2248 = vmatpush1.bf16.msra.mxu0 %v1543
    %2249 = vmatprep.subr.bf16.mxu0 %v1649
    %2250 = vmatpush2.bf16.msra.mxu0 %v1648
    %2251 = vmatprep.subr.bf16.mxu0 %v1642
    %2252 = vmatpush2.bf16.msra.mxu0 %v1641
    %2253 = vmatprep.subr.bf16.mxu0 %v1635
    %2254 = vmatpush2.bf16.msra.mxu0 %v1634
    %2255 = vmatprep.subr.bf16.mxu0 %v1628
    %2256 = vmatpush2.bf16.msra.mxu0 %v1627
    %2257 = vmatprep.subr.bf16.mxu0 %v1621
    %2258 = vmatpush2.bf16.msra.mxu0 %v1620
    %2259 = vmatprep.subr.bf16.mxu0 %v1614
    %2260 = vmatpush2.bf16.msra.mxu0 %v1613
    %2261 = vmatprep.subr.bf16.mxu0 %v1607
    %2262 = vmatpush2.bf16.msra.mxu0 %v1606
    %2263 = vmatprep.subr.bf16.mxu0 %v1600
    %2264 = vmatpush2.bf16.msra.mxu0 %v1599
    %2265 = vmatprep.mubr.bf16.mxu0 %v30
    %2266 = vmatmul.mubr.bf16.gmra.mxu0 %v29
    %v2267 = vpop.f32.mrf.mxu0
    %v2268 = vadd.f32 %v433, %v2267
    %v2269 = vpop.f32.mrf.mxu0
    %v2270 = vadd.f32 %v437, %v2269
    %v2271 = vpop.f32.mrf.mxu0
    %v2272 = vpop.f32.mrf.mxu0
    %2273 = vdwg.mxu0
    %2274 = vmatprep.subr.bf16.mxu0 %v1705
    %2275 = vmatpush1.bf16.msra.mxu0 %v1704
    %2276 = vmatprep.subr.bf16.mxu0 %v1698
    %2277 = vmatpush1.bf16.msra.mxu0 %v1697
    %2278 = vmatprep.subr.bf16.mxu0 %v1691
    %2279 = vmatpush1.bf16.msra.mxu0 %v1690
    %2280 = vmatprep.subr.bf16.mxu0 %v1684
    %2281 = vmatpush1.bf16.msra.mxu0 %v1683
    %2282 = vmatprep.subr.bf16.mxu0 %v1677
    %2283 = vmatpush1.bf16.msra.mxu0 %v1676
    %2284 = vmatprep.subr.bf16.mxu0 %v1670
    %2285 = vmatpush1.bf16.msra.mxu0 %v1669
    %2286 = vmatprep.subr.bf16.mxu0 %v1663
    %2287 = vmatpush1.bf16.msra.mxu0 %v1662
    %2288 = vmatprep.subr.bf16.mxu0 %v1656
    %2289 = vmatpush1.bf16.msra.mxu0 %v1655
    %2290 = vmatprep.subr.bf16.mxu0 %v1761
    %2291 = vmatpush2.bf16.msra.mxu0 %v1760
    %2292 = vmatprep.subr.bf16.mxu0 %v1754
    %2293 = vmatpush2.bf16.msra.mxu0 %v1753
    %2294 = vmatprep.subr.bf16.mxu0 %v1747
    %2295 = vmatpush2.bf16.msra.mxu0 %v1746
    %2296 = vmatprep.subr.bf16.mxu0 %v1740
    %2297 = vmatpush2.bf16.msra.mxu0 %v1739
    %2298 = vmatprep.subr.bf16.mxu0 %v1733
    %2299 = vmatpush2.bf16.msra.mxu0 %v1732
    %2300 = vmatprep.subr.bf16.mxu0 %v1726
    %2301 = vmatpush2.bf16.msra.mxu0 %v1725
    %2302 = vmatprep.subr.bf16.mxu0 %v1719
    %2303 = vmatpush2.bf16.msra.mxu0 %v1718
    %2304 = vmatprep.subr.bf16.mxu0 %v1712
    %2305 = vmatpush2.bf16.msra.mxu0 %v1711
    %2306 = vmatprep.mubr.bf16.mxu0 %v32
    %2307 = vmatmul.mubr.bf16.gmra.mxu0 %v31
    %v2308 = vpop.f32.mrf.mxu0
    %v2309 = vadd.f32 %v2268, %v2308
    %v2310 = vpop.f32.mrf.mxu0
    %v2311 = vadd.f32 %v2270, %v2310
    %v2312 = vpop.f32.mrf.mxu0
    %v2313 = vpop.f32.mrf.mxu0
    %2314 = vdwg.mxu0
    %2315 = vmatprep.subr.bf16.mxu0 %v1817
    %2316 = vmatpush1.bf16.msra.mxu0 %v1816
    %2317 = vmatprep.subr.bf16.mxu0 %v1810
    %2318 = vmatpush1.bf16.msra.mxu0 %v1809
    %2319 = vmatprep.subr.bf16.mxu0 %v1803
    %2320 = vmatpush1.bf16.msra.mxu0 %v1802
    %2321 = vmatprep.subr.bf16.mxu0 %v1796
    %2322 = vmatpush1.bf16.msra.mxu0 %v1795
    %2323 = vmatprep.subr.bf16.mxu0 %v1789
    %2324 = vmatpush1.bf16.msra.mxu0 %v1788
    %2325 = vmatprep.subr.bf16.mxu0 %v1782
    %2326 = vmatpush1.bf16.msra.mxu0 %v1781
    %2327 = vmatprep.subr.bf16.mxu0 %v1775
    %2328 = vmatpush1.bf16.msra.mxu0 %v1774
    %2329 = vmatprep.subr.bf16.mxu0 %v1768
    %2330 = vmatpush1.bf16.msra.mxu0 %v1767
    %2331 = vmatprep.subr.bf16.mxu0 %v1873
    %2332 = vmatpush2.bf16.msra.mxu0 %v1872
    %2333 = vmatprep.subr.bf16.mxu0 %v1866
    %2334 = vmatpush2.bf16.msra.mxu0 %v1865
    %2335 = vmatprep.subr.bf16.mxu0 %v1859
    %2336 = vmatpush2.bf16.msra.mxu0 %v1858
    %2337 = vmatprep.subr.bf16.mxu0 %v1852
    %2338 = vmatpush2.bf16.msra.mxu0 %v1851
    %2339 = vmatprep.subr.bf16.mxu0 %v1845
    %2340 = vmatpush2.bf16.msra.mxu0 %v1844
    %2341 = vmatprep.subr.bf16.mxu0 %v1838
    %2342 = vmatpush2.bf16.msra.mxu0 %v1837
    %2343 = vmatprep.subr.bf16.mxu0 %v1831
    %2344 = vmatpush2.bf16.msra.mxu0 %v1830
    %2345 = vmatprep.subr.bf16.mxu0 %v1824
    %2346 = vmatpush2.bf16.msra.mxu0 %v1823
    %2347 = vmatprep.mubr.bf16.mxu0 %v34
    %2348 = vmatmul.mubr.bf16.gmra.mxu0 %v33
    %v2349 = vpop.f32.mrf.mxu0
    %v2350 = vadd.f32 %v2309, %v2349
    %v2351 = vpop.f32.mrf.mxu0
    %v2352 = vadd.f32 %v2311, %v2351
    %v2353 = vpop.f32.mrf.mxu0
    %v2354 = vpop.f32.mrf.mxu0
    %2355 = vdwg.mxu0
    %2356 = vmatprep.subr.bf16.mxu0 0
    %2357 = vmatpush1.bf16.msra.mxu0 0
    %2358 = vmatprep.subr.bf16.mxu0 0
    %2359 = vmatpush1.bf16.msra.mxu0 0
    %2360 = vmatprep.subr.bf16.mxu0 0
    %2361 = vmatpush1.bf16.msra.mxu0 0
    %2362 = vmatprep.subr.bf16.mxu0 0
    %2363 = vmatpush1.bf16.msra.mxu0 0
    %2364 = vmatprep.subr.bf16.mxu0 0
    %2365 = vmatpush1.bf16.msra.mxu0 0
    %2366 = vmatprep.subr.bf16.mxu0 0
    %2367 = vmatpush1.bf16.msra.mxu0 0
    %2368 = vmatprep.subr.bf16.mxu0 0
    %2369 = vmatpush1.bf16.msra.mxu0 0
    %2370 = vmatprep.subr.bf16.mxu0 %v1880
    %2371 = vmatpush1.bf16.msra.mxu0 %v1879
    %2372 = vmatprep.subr.bf16.mxu0 0
    %2373 = vmatpush2.bf16.msra.mxu0 0
    %2374 = vmatprep.subr.bf16.mxu0 0
    %2375 = vmatpush2.bf16.msra.mxu0 0
    %2376 = vmatprep.subr.bf16.mxu0 0
    %2377 = vmatpush2.bf16.msra.mxu0 0
    %2378 = vmatprep.subr.bf16.mxu0 0
    %2379 = vmatpush2.bf16.msra.mxu0 0
    %2380 = vmatprep.subr.bf16.mxu0 0
    %2381 = vmatpush2.bf16.msra.mxu0 0
    %2382 = vmatprep.subr.bf16.mxu0 0
    %2383 = vmatpush2.bf16.msra.mxu0 0
    %2384 = vmatprep.subr.bf16.mxu0 0
    %2385 = vmatpush2.bf16.msra.mxu0 0
    %2386 = vmatprep.subr.bf16.mxu0 0
    %2387 = vmatpush2.bf16.msra.mxu0 0
    %2388 = vmatprep.mubr.bf16.mxu0 0
    %2389 = vmatmul.mubr.bf16.gmra.mxu0 %v2231
    %v2390 = vpop.f32.mrf.mxu0
    %v2391 = vadd.f32 %v2350, %v2390
    %v2392 = vpop.f32.mrf.mxu0
    %v2393 = vadd.f32 %v2352, %v2392
    %v2394 = vpop.f32.mrf.mxu0
    %v2395 = vpop.f32.mrf.mxu0
    %2396 = vdwg.mxu0
    %2397 = vmatprep.subr.bf16.mxu0 %v1595
    %2398 = vmatpush1.bf16.msra.mxu0 %v1594
    %2399 = vmatprep.subr.bf16.mxu0 %v1588
    %2400 = vmatpush1.bf16.msra.mxu0 %v1587
    %2401 = vmatprep.subr.bf16.mxu0 %v1581
    %2402 = vmatpush1.bf16.msra.mxu0 %v1580
    %2403 = vmatprep.subr.bf16.mxu0 %v1574
    %2404 = vmatpush1.bf16.msra.mxu0 %v1573
    %2405 = vmatprep.subr.bf16.mxu0 %v1567
    %2406 = vmatpush1.bf16.msra.mxu0 %v1566
    %2407 = vmatprep.subr.bf16.mxu0 %v1560
    %2408 = vmatpush1.bf16.msra.mxu0 %v1559
    %2409 = vmatprep.subr.bf16.mxu0 %v1553
    %2410 = vmatpush1.bf16.msra.mxu0 %v1552
    %2411 = vmatprep.subr.bf16.mxu0 %v1546
    %2412 = vmatpush1.bf16.msra.mxu0 %v1545
    %2413 = vmatprep.subr.bf16.mxu0 %v1651
    %2414 = vmatpush2.bf16.msra.mxu0 %v1650
    %2415 = vmatprep.subr.bf16.mxu0 %v1644
    %2416 = vmatpush2.bf16.msra.mxu0 %v1643
    %2417 = vmatprep.subr.bf16.mxu0 %v1637
    %2418 = vmatpush2.bf16.msra.mxu0 %v1636
    %2419 = vmatprep.subr.bf16.mxu0 %v1630
    %2420 = vmatpush2.bf16.msra.mxu0 %v1629
    %2421 = vmatprep.subr.bf16.mxu0 %v1623
    %2422 = vmatpush2.bf16.msra.mxu0 %v1622
    %2423 = vmatprep.subr.bf16.mxu0 %v1616
    %2424 = vmatpush2.bf16.msra.mxu0 %v1615
    %2425 = vmatprep.subr.bf16.mxu0 %v1609
    %2426 = vmatpush2.bf16.msra.mxu0 %v1608
    %2427 = vmatprep.subr.bf16.mxu0 %v1602
    %2428 = vmatpush2.bf16.msra.mxu0 %v1601
    %2429 = vmatprep.mubr.bf16.mxu0 %v30
    %2430 = vmatmul.mubr.bf16.gmra.mxu0 %v29
    %v2431 = vpop.f32.mrf.mxu0
    %v2432 = vadd.f32 %v441, %v2431
    %v2433 = vpop.f32.mrf.mxu0
    %v2434 = vadd.f32 %v445, %v2433
    %v2435 = vpop.f32.mrf.mxu0
    %v2436 = vpop.f32.mrf.mxu0
    %2437 = vdwg.mxu0
    %2438 = vmatprep.subr.bf16.mxu0 %v1707
    %2439 = vmatpush1.bf16.msra.mxu0 %v1706
    %2440 = vmatprep.subr.bf16.mxu0 %v1700
    %2441 = vmatpush1.bf16.msra.mxu0 %v1699
    %2442 = vmatprep.subr.bf16.mxu0 %v1693
    %2443 = vmatpush1.bf16.msra.mxu0 %v1692
    %2444 = vmatprep.subr.bf16.mxu0 %v1686
    %2445 = vmatpush1.bf16.msra.mxu0 %v1685
    %2446 = vmatprep.subr.bf16.mxu0 %v1679
    %2447 = vmatpush1.bf16.msra.mxu0 %v1678
    %2448 = vmatprep.subr.bf16.mxu0 %v1672
    %2449 = vmatpush1.bf16.msra.mxu0 %v1671
    %2450 = vmatprep.subr.bf16.mxu0 %v1665
    %2451 = vmatpush1.bf16.msra.mxu0 %v1664
    %2452 = vmatprep.subr.bf16.mxu0 %v1658
    %2453 = vmatpush1.bf16.msra.mxu0 %v1657
    %2454 = vmatprep.subr.bf16.mxu0 %v1763
    %2455 = vmatpush2.bf16.msra.mxu0 %v1762
    %2456 = vmatprep.subr.bf16.mxu0 %v1756
    %2457 = vmatpush2.bf16.msra.mxu0 %v1755
    %2458 = vmatprep.subr.bf16.mxu0 %v1749
    %2459 = vmatpush2.bf16.msra.mxu0 %v1748
    %2460 = vmatprep.subr.bf16.mxu0 %v1742
    %2461 = vmatpush2.bf16.msra.mxu0 %v1741
    %2462 = vmatprep.subr.bf16.mxu0 %v1735
    %2463 = vmatpush2.bf16.msra.mxu0 %v1734
    %2464 = vmatprep.subr.bf16.mxu0 %v1728
    %2465 = vmatpush2.bf16.msra.mxu0 %v1727
    %2466 = vmatprep.subr.bf16.mxu0 %v1721
    %2467 = vmatpush2.bf16.msra.mxu0 %v1720
    %2468 = vmatprep.subr.bf16.mxu0 %v1714
    %2469 = vmatpush2.bf16.msra.mxu0 %v1713
    %2470 = vmatprep.mubr.bf16.mxu0 %v32
    %2471 = vmatmul.mubr.bf16.gmra.mxu0 %v31
    %v2472 = vpop.f32.mrf.mxu0
    %v2473 = vadd.f32 %v2432, %v2472
    %v2474 = vpop.f32.mrf.mxu0
    %v2475 = vadd.f32 %v2434, %v2474
    %v2476 = vpop.f32.mrf.mxu0
    %v2477 = vpop.f32.mrf.mxu0
    %2478 = vdwg.mxu0
    %2479 = vmatprep.subr.bf16.mxu0 %v1819
    %2480 = vmatpush1.bf16.msra.mxu0 %v1818
    %2481 = vmatprep.subr.bf16.mxu0 %v1812
    %2482 = vmatpush1.bf16.msra.mxu0 %v1811
    %2483 = vmatprep.subr.bf16.mxu0 %v1805
    %2484 = vmatpush1.bf16.msra.mxu0 %v1804
    %2485 = vmatprep.subr.bf16.mxu0 %v1798
    %2486 = vmatpush1.bf16.msra.mxu0 %v1797
    %2487 = vmatprep.subr.bf16.mxu0 %v1791
    %2488 = vmatpush1.bf16.msra.mxu0 %v1790
    %2489 = vmatprep.subr.bf16.mxu0 %v1784
    %2490 = vmatpush1.bf16.msra.mxu0 %v1783
    %2491 = vmatprep.subr.bf16.mxu0 %v1777
    %2492 = vmatpush1.bf16.msra.mxu0 %v1776
    %2493 = vmatprep.subr.bf16.mxu0 %v1770
    %2494 = vmatpush1.bf16.msra.mxu0 %v1769
    %2495 = vmatprep.subr.bf16.mxu0 %v1875
    %2496 = vmatpush2.bf16.msra.mxu0 %v1874
    %2497 = vmatprep.subr.bf16.mxu0 %v1868
    %2498 = vmatpush2.bf16.msra.mxu0 %v1867
    %2499 = vmatprep.subr.bf16.mxu0 %v1861
    %2500 = vmatpush2.bf16.msra.mxu0 %v1860
    %2501 = vmatprep.subr.bf16.mxu0 %v1854
    %2502 = vmatpush2.bf16.msra.mxu0 %v1853
    %2503 = vmatprep.subr.bf16.mxu0 %v1847
    %2504 = vmatpush2.bf16.msra.mxu0 %v1846
    %2505 = vmatprep.subr.bf16.mxu0 %v1840
    %2506 = vmatpush2.bf16.msra.mxu0 %v1839
    %2507 = vmatprep.subr.bf16.mxu0 %v1833
    %2508 = vmatpush2.bf16.msra.mxu0 %v1832
    %2509 = vmatprep.subr.bf16.mxu0 %v1826
    %2510 = vmatpush2.bf16.msra.mxu0 %v1825
    %2511 = vmatprep.mubr.bf16.mxu0 %v34
    %2512 = vmatmul.mubr.bf16.gmra.mxu0 %v33
    %v2513 = vpop.f32.mrf.mxu0
    %v2514 = vadd.f32 %v2473, %v2513
    %v2515 = vpop.f32.mrf.mxu0
    %v2516 = vadd.f32 %v2475, %v2515
    %v2517 = vpop.f32.mrf.mxu0
    %v2518 = vpop.f32.mrf.mxu0
    %2519 = vdwg.mxu0
    %2520 = vmatprep.subr.bf16.mxu0 0
    %2521 = vmatpush1.bf16.msra.mxu0 0
    %2522 = vmatprep.subr.bf16.mxu0 0
    %2523 = vmatpush1.bf16.msra.mxu0 0
    %2524 = vmatprep.subr.bf16.mxu0 0
    %2525 = vmatpush1.bf16.msra.mxu0 0
    %2526 = vmatprep.subr.bf16.mxu0 0
    %2527 = vmatpush1.bf16.msra.mxu0 0
    %2528 = vmatprep.subr.bf16.mxu0 0
    %2529 = vmatpush1.bf16.msra.mxu0 0
    %2530 = vmatprep.subr.bf16.mxu0 0
    %2531 = vmatpush1.bf16.msra.mxu0 0
    %2532 = vmatprep.subr.bf16.mxu0 0
    %2533 = vmatpush1.bf16.msra.mxu0 0
    %2534 = vmatprep.subr.bf16.mxu0 %v1882
    %2535 = vmatpush1.bf16.msra.mxu0 %v1881
    %2536 = vmatprep.subr.bf16.mxu0 0
    %2537 = vmatpush2.bf16.msra.mxu0 0
    %2538 = vmatprep.subr.bf16.mxu0 0
    %2539 = vmatpush2.bf16.msra.mxu0 0
    %2540 = vmatprep.subr.bf16.mxu0 0
    %2541 = vmatpush2.bf16.msra.mxu0 0
    %2542 = vmatprep.subr.bf16.mxu0 0
    %2543 = vmatpush2.bf16.msra.mxu0 0
    %2544 = vmatprep.subr.bf16.mxu0 0
    %2545 = vmatpush2.bf16.msra.mxu0 0
    %2546 = vmatprep.subr.bf16.mxu0 0
    %2547 = vmatpush2.bf16.msra.mxu0 0
    %2548 = vmatprep.subr.bf16.mxu0 0
    %2549 = vmatpush2.bf16.msra.mxu0 0
    %2550 = vmatprep.subr.bf16.mxu0 0
    %2551 = vmatpush2.bf16.msra.mxu0 0
    %2552 = vmatprep.mubr.bf16.mxu0 0
    %2553 = vmatmul.mubr.bf16.gmra.mxu0 %v2231
    %v2554 = vpop.f32.mrf.mxu0
    %v2555 = vadd.f32 %v2514, %v2554
    %v2556 = vpop.f32.mrf.mxu0
    %v2557 = vadd.f32 %v2516, %v2556
    %v2558 = vpop.f32.mrf.mxu0
    %v2559 = vpop.f32.mrf.mxu0
    %2560 = vdwg.mxu0
    %2561 = vmatprep.subr.bf16.mxu0 %v1597
    %2562 = vmatpush1.bf16.msra.mxu0 %v1596
    %2563 = vmatprep.subr.bf16.mxu0 %v1590
    %2564 = vmatpush1.bf16.msra.mxu0 %v1589
    %2565 = vmatprep.subr.bf16.mxu0 %v1583
    %2566 = vmatpush1.bf16.msra.mxu0 %v1582
    %2567 = vmatprep.subr.bf16.mxu0 %v1576
    %2568 = vmatpush1.bf16.msra.mxu0 %v1575
    %2569 = vmatprep.subr.bf16.mxu0 %v1569
    %2570 = vmatpush1.bf16.msra.mxu0 %v1568
    %2571 = vmatprep.subr.bf16.mxu0 %v1562
    %2572 = vmatpush1.bf16.msra.mxu0 %v1561
    %2573 = vmatprep.subr.bf16.mxu0 %v1555
    %2574 = vmatpush1.bf16.msra.mxu0 %v1554
    %2575 = vmatprep.subr.bf16.mxu0 %v1548
    %2576 = vmatpush1.bf16.msra.mxu0 %v1547
    %2577 = vmatprep.subr.bf16.mxu0 %v1653
    %2578 = vmatpush2.bf16.msra.mxu0 %v1652
    %2579 = vmatprep.subr.bf16.mxu0 %v1646
    %2580 = vmatpush2.bf16.msra.mxu0 %v1645
    %2581 = vmatprep.subr.bf16.mxu0 %v1639
    %2582 = vmatpush2.bf16.msra.mxu0 %v1638
    %2583 = vmatprep.subr.bf16.mxu0 %v1632
    %2584 = vmatpush2.bf16.msra.mxu0 %v1631
    %2585 = vmatprep.subr.bf16.mxu0 %v1625
    %2586 = vmatpush2.bf16.msra.mxu0 %v1624
    %2587 = vmatprep.subr.bf16.mxu0 %v1618
    %2588 = vmatpush2.bf16.msra.mxu0 %v1617
    %2589 = vmatprep.subr.bf16.mxu0 %v1611
    %2590 = vmatpush2.bf16.msra.mxu0 %v1610
    %2591 = vmatprep.subr.bf16.mxu0 %v1604
    %2592 = vmatpush2.bf16.msra.mxu0 %v1603
    %2593 = vmatprep.mubr.bf16.mxu0 %v30
    %2594 = vmatmul.mubr.bf16.gmra.mxu0 %v29
    %v2595 = vpop.f32.mrf.mxu0
    %v2596 = vadd.f32 %v449, %v2595
    %v2597 = vpop.f32.mrf.mxu0
    %v2598 = vadd.f32 %v453, %v2597
    %v2599 = vpop.f32.mrf.mxu0
    %v2600 = vpop.f32.mrf.mxu0
    %2601 = vdwg.mxu0
    %2602 = vmatprep.subr.bf16.mxu0 %v1709
    %2603 = vmatpush1.bf16.msra.mxu0 %v1708
    %2604 = vmatprep.subr.bf16.mxu0 %v1702
    %2605 = vmatpush1.bf16.msra.mxu0 %v1701
    %2606 = vmatprep.subr.bf16.mxu0 %v1695
    %2607 = vmatpush1.bf16.msra.mxu0 %v1694
    %2608 = vmatprep.subr.bf16.mxu0 %v1688
    %2609 = vmatpush1.bf16.msra.mxu0 %v1687
    %2610 = vmatprep.subr.bf16.mxu0 %v1681
    %2611 = vmatpush1.bf16.msra.mxu0 %v1680
    %2612 = vmatprep.subr.bf16.mxu0 %v1674
    %2613 = vmatpush1.bf16.msra.mxu0 %v1673
    %2614 = vmatprep.subr.bf16.mxu0 %v1667
    %2615 = vmatpush1.bf16.msra.mxu0 %v1666
    %2616 = vmatprep.subr.bf16.mxu0 %v1660
    %2617 = vmatpush1.bf16.msra.mxu0 %v1659
    %2618 = vmatprep.subr.bf16.mxu0 %v1765
    %2619 = vmatpush2.bf16.msra.mxu0 %v1764
    %2620 = vmatprep.subr.bf16.mxu0 %v1758
    %2621 = vmatpush2.bf16.msra.mxu0 %v1757
    %2622 = vmatprep.subr.bf16.mxu0 %v1751
    %2623 = vmatpush2.bf16.msra.mxu0 %v1750
    %2624 = vmatprep.subr.bf16.mxu0 %v1744
    %2625 = vmatpush2.bf16.msra.mxu0 %v1743
    %2626 = vmatprep.subr.bf16.mxu0 %v1737
    %2627 = vmatpush2.bf16.msra.mxu0 %v1736
    %2628 = vmatprep.subr.bf16.mxu0 %v1730
    %2629 = vmatpush2.bf16.msra.mxu0 %v1729
    %2630 = vmatprep.subr.bf16.mxu0 %v1723
    %2631 = vmatpush2.bf16.msra.mxu0 %v1722
    %2632 = vmatprep.subr.bf16.mxu0 %v1716
    %2633 = vmatpush2.bf16.msra.mxu0 %v1715
    %2634 = vmatprep.mubr.bf16.mxu0 %v32
    %2635 = vmatmul.mubr.bf16.gmra.mxu0 %v31
    %v2636 = vpop.f32.mrf.mxu0
    %v2637 = vadd.f32 %v2596, %v2636
    %v2638 = vpop.f32.mrf.mxu0
    %v2639 = vadd.f32 %v2598, %v2638
    %v2640 = vpop.f32.mrf.mxu0
    %v2641 = vpop.f32.mrf.mxu0
    %2642 = vdwg.mxu0
    %2643 = vmatprep.subr.bf16.mxu0 %v1821
    %2644 = vmatpush1.bf16.msra.mxu0 %v1820
    %2645 = vmatprep.subr.bf16.mxu0 %v1814
    %2646 = vmatpush1.bf16.msra.mxu0 %v1813
    %2647 = vmatprep.subr.bf16.mxu0 %v1807
    %2648 = vmatpush1.bf16.msra.mxu0 %v1806
    %2649 = vmatprep.subr.bf16.mxu0 %v1800
    %2650 = vmatpush1.bf16.msra.mxu0 %v1799
    %2651 = vmatprep.subr.bf16.mxu0 %v1793
    %2652 = vmatpush1.bf16.msra.mxu0 %v1792
    %2653 = vmatprep.subr.bf16.mxu0 %v1786
    %2654 = vmatpush1.bf16.msra.mxu0 %v1785
    %2655 = vmatprep.subr.bf16.mxu0 %v1779
    %2656 = vmatpush1.bf16.msra.mxu0 %v1778
    %2657 = vmatprep.subr.bf16.mxu0 %v1772
    %2658 = vmatpush1.bf16.msra.mxu0 %v1771
    %2659 = vmatprep.subr.bf16.mxu0 %v1877
    %2660 = vmatpush2.bf16.msra.mxu0 %v1876
    %2661 = vmatprep.subr.bf16.mxu0 %v1870
    %2662 = vmatpush2.bf16.msra.mxu0 %v1869
    %2663 = vmatprep.subr.bf16.mxu0 %v1863
    %2664 = vmatpush2.bf16.msra.mxu0 %v1862
    %2665 = vmatprep.subr.bf16.mxu0 %v1856
    %2666 = vmatpush2.bf16.msra.mxu0 %v1855
    %2667 = vmatprep.subr.bf16.mxu0 %v1849
    %2668 = vmatpush2.bf16.msra.mxu0 %v1848
    %2669 = vmatprep.subr.bf16.mxu0 %v1842
    %2670 = vmatpush2.bf16.msra.mxu0 %v1841
    %2671 = vmatprep.subr.bf16.mxu0 %v1835
    %2672 = vmatpush2.bf16.msra.mxu0 %v1834
    %2673 = vmatprep.subr.bf16.mxu0 %v1828
    %2674 = vmatpush2.bf16.msra.mxu0 %v1827
    %2675 = vmatprep.mubr.bf16.mxu0 %v34
    %2676 = vmatmul.mubr.bf16.gmra.mxu0 %v33
    %v2677 = vpop.f32.mrf.mxu0
    %v2678 = vadd.f32 %v2637, %v2677
    %v2679 = vpop.f32.mrf.mxu0
    %v2680 = vadd.f32 %v2639, %v2679
    %v2681 = vpop.f32.mrf.mxu0
    %v2682 = vpop.f32.mrf.mxu0
    %2683 = vdwg.mxu0
    %2684 = vmatprep.subr.bf16.mxu0 0
    %2685 = vmatpush1.bf16.msra.mxu0 0
    %2686 = vmatprep.subr.bf16.mxu0 0
    %2687 = vmatpush1.bf16.msra.mxu0 0
    %2688 = vmatprep.subr.bf16.mxu0 0
    %2689 = vmatpush1.bf16.msra.mxu0 0
    %2690 = vmatprep.subr.bf16.mxu0 0
    %2691 = vmatpush1.bf16.msra.mxu0 0
    %2692 = vmatprep.subr.bf16.mxu0 0
    %2693 = vmatpush1.bf16.msra.mxu0 0
    %2694 = vmatprep.subr.bf16.mxu0 0
    %2695 = vmatpush1.bf16.msra.mxu0 0
    %2696 = vmatprep.subr.bf16.mxu0 0
    %2697 = vmatpush1.bf16.msra.mxu0 0
    %2698 = vmatprep.subr.bf16.mxu0 %v1884
    %2699 = vmatpush1.bf16.msra.mxu0 %v1883
    %2700 = vmatprep.subr.bf16.mxu0 0
    %2701 = vmatpush2.bf16.msra.mxu0 0
    %2702 = vmatprep.subr.bf16.mxu0 0
    %2703 = vmatpush2.bf16.msra.mxu0 0
    %2704 = vmatprep.subr.bf16.mxu0 0
    %2705 = vmatpush2.bf16.msra.mxu0 0
    %2706 = vmatprep.subr.bf16.mxu0 0
    %2707 = vmatpush2.bf16.msra.mxu0 0
    %2708 = vmatprep.subr.bf16.mxu0 0
    %2709 = vmatpush2.bf16.msra.mxu0 0
    %2710 = vmatprep.subr.bf16.mxu0 0
    %2711 = vmatpush2.bf16.msra.mxu0 0
    %2712 = vmatprep.subr.bf16.mxu0 0
    %2713 = vmatpush2.bf16.msra.mxu0 0
    %2714 = vmatprep.subr.bf16.mxu0 0
    %2715 = vmatpush2.bf16.msra.mxu0 0
    %2716 = vmatprep.mubr.bf16.mxu0 0
    %2717 = vmatmul.mubr.bf16.gmra.mxu0 %v2231
    %v2718 = vpop.f32.mrf.mxu0
    %v2719 = vadd.f32 %v2678, %v2718
    %v2720 = vpop.f32.mrf.mxu0
    %v2721 = vadd.f32 %v2680, %v2720
    %v2722 = vpop.f32.mrf.mxu0
    %v2723 = vpop.f32.mrf.mxu0
    %2724 = vdwg.mxu0
    %2725 = vmatprep.subr.bf16.mxu0 0
    %2726 = vmatpush1.bf16.msra.mxu0 %v1598
    %2727 = vmatprep.subr.bf16.mxu0 0
    %2728 = vmatpush1.bf16.msra.mxu0 %v1591
    %2729 = vmatprep.subr.bf16.mxu0 0
    %2730 = vmatpush1.bf16.msra.mxu0 %v1584
    %2731 = vmatprep.subr.bf16.mxu0 0
    %2732 = vmatpush1.bf16.msra.mxu0 %v1577
    %2733 = vmatprep.subr.bf16.mxu0 0
    %2734 = vmatpush1.bf16.msra.mxu0 %v1570
    %2735 = vmatprep.subr.bf16.mxu0 0
    %2736 = vmatpush1.bf16.msra.mxu0 %v1563
    %2737 = vmatprep.subr.bf16.mxu0 0
    %2738 = vmatpush1.bf16.msra.mxu0 %v1556
    %2739 = vmatprep.subr.bf16.mxu0 0
    %2740 = vmatpush1.bf16.msra.mxu0 %v1549
    %2741 = vmatprep.subr.bf16.mxu0 0
    %2742 = vmatpush2.bf16.msra.mxu0 %v1654
    %2743 = vmatprep.subr.bf16.mxu0 0
    %2744 = vmatpush2.bf16.msra.mxu0 %v1647
    %2745 = vmatprep.subr.bf16.mxu0 0
    %2746 = vmatpush2.bf16.msra.mxu0 %v1640
    %2747 = vmatprep.subr.bf16.mxu0 0
    %2748 = vmatpush2.bf16.msra.mxu0 %v1633
    %2749 = vmatprep.subr.bf16.mxu0 0
    %2750 = vmatpush2.bf16.msra.mxu0 %v1626
    %2751 = vmatprep.subr.bf16.mxu0 0
    %2752 = vmatpush2.bf16.msra.mxu0 %v1619
    %2753 = vmatprep.subr.bf16.mxu0 0
    %2754 = vmatpush2.bf16.msra.mxu0 %v1612
    %2755 = vmatprep.subr.bf16.mxu0 0
    %2756 = vmatpush2.bf16.msra.mxu0 %v1605
    %2757 = vmatprep.mubr.bf16.mxu0 %v30
    %2758 = vmatmul.mubr.bf16.gmra.mxu0 %v29
    %v2759 = vpop.f32.mrf.mxu0
    %v2760 = vadd.f32 %v457, %v2759
    %v2761 = vpop.f32.mrf.mxu0
    %v2762 = vpop.f32.mrf.mxu0
    %v2763 = vpop.f32.mrf.mxu0
    %2764 = vdwg.mxu0
    %2765 = vmatprep.subr.bf16.mxu0 0
    %2766 = vmatpush1.bf16.msra.mxu0 %v1710
    %2767 = vmatprep.subr.bf16.mxu0 0
    %2768 = vmatpush1.bf16.msra.mxu0 %v1703
    %2769 = vmatprep.subr.bf16.mxu0 0
    %2770 = vmatpush1.bf16.msra.mxu0 %v1696
    %2771 = vmatprep.subr.bf16.mxu0 0
    %2772 = vmatpush1.bf16.msra.mxu0 %v1689
    %2773 = vmatprep.subr.bf16.mxu0 0
    %2774 = vmatpush1.bf16.msra.mxu0 %v1682
    %2775 = vmatprep.subr.bf16.mxu0 0
    %2776 = vmatpush1.bf16.msra.mxu0 %v1675
    %2777 = vmatprep.subr.bf16.mxu0 0
    %2778 = vmatpush1.bf16.msra.mxu0 %v1668
    %2779 = vmatprep.subr.bf16.mxu0 0
    %2780 = vmatpush1.bf16.msra.mxu0 %v1661
    %2781 = vmatprep.subr.bf16.mxu0 0
    %2782 = vmatpush2.bf16.msra.mxu0 %v1766
    %2783 = vmatprep.subr.bf16.mxu0 0
    %2784 = vmatpush2.bf16.msra.mxu0 %v1759
    %2785 = vmatprep.subr.bf16.mxu0 0
    %2786 = vmatpush2.bf16.msra.mxu0 %v1752
    %2787 = vmatprep.subr.bf16.mxu0 0
    %2788 = vmatpush2.bf16.msra.mxu0 %v1745
    %2789 = vmatprep.subr.bf16.mxu0 0
    %2790 = vmatpush2.bf16.msra.mxu0 %v1738
    %2791 = vmatprep.subr.bf16.mxu0 0
    %2792 = vmatpush2.bf16.msra.mxu0 %v1731
    %2793 = vmatprep.subr.bf16.mxu0 0
    %2794 = vmatpush2.bf16.msra.mxu0 %v1724
    %2795 = vmatprep.subr.bf16.mxu0 0
    %2796 = vmatpush2.bf16.msra.mxu0 %v1717
    %2797 = vmatprep.mubr.bf16.mxu0 %v32
    %2798 = vmatmul.mubr.bf16.gmra.mxu0 %v31
    %v2799 = vpop.f32.mrf.mxu0
    %v2800 = vadd.f32 %v2760, %v2799
    %v2801 = vpop.f32.mrf.mxu0
    %v2802 = vpop.f32.mrf.mxu0
    %v2803 = vpop.f32.mrf.mxu0
    %2804 = vdwg.mxu0
    %2805 = vmatprep.subr.bf16.mxu0 0
    %2806 = vmatpush1.bf16.msra.mxu0 %v1822
    %2807 = vmatprep.subr.bf16.mxu0 0
    %2808 = vmatpush1.bf16.msra.mxu0 %v1815
    %2809 = vmatprep.subr.bf16.mxu0 0
    %2810 = vmatpush1.bf16.msra.mxu0 %v1808
    %2811 = vmatprep.subr.bf16.mxu0 0
    %2812 = vmatpush1.bf16.msra.mxu0 %v1801
    %2813 = vmatprep.subr.bf16.mxu0 0
    %2814 = vmatpush1.bf16.msra.mxu0 %v1794
    %2815 = vmatprep.subr.bf16.mxu0 0
    %2816 = vmatpush1.bf16.msra.mxu0 %v1787
    %2817 = vmatprep.subr.bf16.mxu0 0
    %2818 = vmatpush1.bf16.msra.mxu0 %v1780
    %2819 = vmatprep.subr.bf16.mxu0 0
    %2820 = vmatpush1.bf16.msra.mxu0 %v1773
    %2821 = vmatprep.subr.bf16.mxu0 0
    %2822 = vmatpush2.bf16.msra.mxu0 %v1878
    %2823 = vmatprep.subr.bf16.mxu0 0
    %2824 = vmatpush2.bf16.msra.mxu0 %v1871
    %2825 = vmatprep.subr.bf16.mxu0 0
    %2826 = vmatpush2.bf16.msra.mxu0 %v1864
    %2827 = vmatprep.subr.bf16.mxu0 0
    %2828 = vmatpush2.bf16.msra.mxu0 %v1857
    %2829 = vmatprep.subr.bf16.mxu0 0
    %2830 = vmatpush2.bf16.msra.mxu0 %v1850
    %2831 = vmatprep.subr.bf16.mxu0 0
    %2832 = vmatpush2.bf16.msra.mxu0 %v1843
    %2833 = vmatprep.subr.bf16.mxu0 0
    %2834 = vmatpush2.bf16.msra.mxu0 %v1836
    %2835 = vmatprep.subr.bf16.mxu0 0
    %2836 = vmatpush2.bf16.msra.mxu0 %v1829
    %2837 = vmatprep.mubr.bf16.mxu0 %v34
    %2838 = vmatmul.mubr.bf16.gmra.mxu0 %v33
    %v2839 = vpop.f32.mrf.mxu0
    %v2840 = vadd.f32 %v2800, %v2839
    %v2841 = vpop.f32.mrf.mxu0
    %v2842 = vpop.f32.mrf.mxu0
    %v2843 = vpop.f32.mrf.mxu0
    %2844 = vdwg.mxu0
    %2845 = vmatprep.subr.bf16.mxu0 0
    %2846 = vmatpush1.bf16.msra.mxu0 0
    %2847 = vmatprep.subr.bf16.mxu0 0
    %2848 = vmatpush1.bf16.msra.mxu0 0
    %2849 = vmatprep.subr.bf16.mxu0 0
    %2850 = vmatpush1.bf16.msra.mxu0 0
    %2851 = vmatprep.subr.bf16.mxu0 0
    %2852 = vmatpush1.bf16.msra.mxu0 0
    %2853 = vmatprep.subr.bf16.mxu0 0
    %2854 = vmatpush1.bf16.msra.mxu0 0
    %2855 = vmatprep.subr.bf16.mxu0 0
    %2856 = vmatpush1.bf16.msra.mxu0 0
    %2857 = vmatprep.subr.bf16.mxu0 0
    %2858 = vmatpush1.bf16.msra.mxu0 0
    %2859 = vmatprep.subr.bf16.mxu0 0
    %2860 = vmatpush1.bf16.msra.mxu0 %v1885
    %2861 = vmatprep.subr.bf16.mxu0 0
    %2862 = vmatpush2.bf16.msra.mxu0 0
    %2863 = vmatprep.subr.bf16.mxu0 0
    %2864 = vmatpush2.bf16.msra.mxu0 0
    %2865 = vmatprep.subr.bf16.mxu0 0
    %2866 = vmatpush2.bf16.msra.mxu0 0
    %2867 = vmatprep.subr.bf16.mxu0 0
    %2868 = vmatpush2.bf16.msra.mxu0 0
    %2869 = vmatprep.subr.bf16.mxu0 0
    %2870 = vmatpush2.bf16.msra.mxu0 0
    %2871 = vmatprep.subr.bf16.mxu0 0
    %2872 = vmatpush2.bf16.msra.mxu0 0
    %2873 = vmatprep.subr.bf16.mxu0 0
    %2874 = vmatpush2.bf16.msra.mxu0 0
    %2875 = vmatprep.subr.bf16.mxu0 0
    %2876 = vmatpush2.bf16.msra.mxu0 0
    %2877 = vmatprep.mubr.bf16.mxu0 0
    %2878 = vmatmul.mubr.bf16.gmra.mxu0 %v2231
    %v2879 = vpop.f32.mrf.mxu0
    %v2880 = vadd.f32 %v2840, %v2879
    %v2881 = vpop.f32.mrf.mxu0
    %v2882 = vpop.f32.mrf.mxu0
    %v2883 = vpop.f32.mrf.mxu0
    %2884 = vdwg.mxu0
    %v2885 = vmax.f32 %v2391, 0.0
    %v2886 = vmax.f32 %v2393, 0.0
    %v2887 = vmax.f32 %v2555, 0.0
    %v2888 = vmax.f32 %v2557, 0.0
    %v2889 = vmax.f32 %v2719, 0.0
    %v2890 = vmax.f32 %v2721, 0.0
    %v2891 = vmax.f32 %v2880, 0.0
    %v2892 = vpack.c.bf16 %v2885, %v2885
    %v2893 = vpack.c.bf16 %v2886, %v2886
    %v2894 = vpack.c.bf16 %v2887, %v2887
    %v2895 = vpack.c.bf16 %v2888, %v2888
    %v2896 = vpack.c.bf16 %v2889, %v2889
    %v2897 = vpack.c.bf16 %v2890, %v2890
    %v2898 = vpack.c.bf16 %v2891, %v2891
    %v2899 = vld [vmem:[%s3] sm:$0xf]
    %v2900 = vld [vmem:[%s3 + $0x4] sm:$0xf]
    %v2901 = vld [vmem:[%s3 + $0x8] sm:$0xf]
    %v2902 = vld [vmem:[%s3 + $0xc] sm:$0xf]
    %v2903 = vld [vmem:[%s3 + $0x10] sm:$0xf]
    %v2904 = vld [vmem:[%s3 + $0x14] sm:$0xf]
    %v2905 = vld [vmem:[%s3 + $0x18] sm:$0xf]
    %v2906 = vld [vmem:[%s3 + $0x1c] sm:$0xf]
    %v2907 = vld [vmem:[%s3 + $0x20] sm:$0xf]
    %v2908 = vld [vmem:[%s3 + $0x24] sm:$0xf]
    %v2909 = vld [vmem:[%s3 + $0x28] sm:$0xf]
    %v2910 = vld [vmem:[%s3 + $0x2c] sm:$0xf]
    %v2911 = vld [vmem:[%s3 + $0x30] sm:$0xf]
    %v2912 = vld [vmem:[%s3 + $0x34] sm:$0xf]
    %v2913 = vld [vmem:[%s3 + $0x38] sm:$0xf]
    %v2914 = vld [vmem:[%s3 + $0x3c] sm:$0xf]
    %v2915 = vld [vmem:[%s3 + $0x40] sm:$0xf]
    %v2916 = vld [vmem:[%s3 + $0x44] sm:$0xf]
    %v2917 = vld [vmem:[%s3 + $0x48] sm:$0xf]
    %v2918 = vld [vmem:[%s3 + $0x4c] sm:$0xf]
    %v2919 = vld [vmem:[%s3 + $0x50] sm:$0xf]
    %v2920 = vld [vmem:[%s3 + $0x54] sm:$0xf]
    %v2921 = vld [vmem:[%s3 + $0x58] sm:$0xf]
    %v2922 = vld [vmem:[%s3 + $0x5c] sm:$0xf]
    %v2923 = vld [vmem:[%s3 + $0x60] sm:$0xf]
    %v2924 = vld [vmem:[%s3 + $0x64] sm:$0xf]
    %v2925 = vld [vmem:[%s3 + $0x68] sm:$0xf]
    %v2926 = vld [vmem:[%s3 + $0x6c] sm:$0xf]
    %v2927 = vld [vmem:[%s3 + $0x70] sm:$0xf]
    %v2928 = vld [vmem:[%s3 + $0x74] sm:$0xf]
    %v2929 = vld [vmem:[%s3 + $0x78] sm:$0xf]
    %v2930 = vld [vmem:[%s3 + $0x7c] sm:$0xf]
    %v2931 = vld [vmem:[%s3 + $0x80] sm:$0xf]
    %v2932 = vld [vmem:[%s3 + $0x84] sm:$0xf]
    %v2933 = vld [vmem:[%s3 + $0x88] sm:$0xf]
    %v2934 = vld [vmem:[%s3 + $0x8c] sm:$0xf]
    %v2935 = vld [vmem:[%s3 + $0x90] sm:$0xf]
    %v2936 = vld [vmem:[%s3 + $0x94] sm:$0xf]
    %v2937 = vld [vmem:[%s3 + $0x98] sm:$0xf]
    %v2938 = vld [vmem:[%s3 + $0x9c] sm:$0xf]
    %v2939 = vld [vmem:[%s3 + $0xa0] sm:$0xf]
    %v2940 = vld [vmem:[%s3 + $0xa4] sm:$0xf]
    %v2941 = vld [vmem:[%s3 + $0xa8] sm:$0xf]
    %v2942 = vld [vmem:[%s3 + $0xac] sm:$0xf]
    %v2943 = vld [vmem:[%s3 + $0xb0] sm:$0xf]
    %v2944 = vld [vmem:[%s3 + $0xb4] sm:$0xf]
    %v2945 = vld [vmem:[%s3 + $0xb8] sm:$0xf]
    %v2946 = vld [vmem:[%s3 + $0xbc] sm:$0xf]
    %v2947 = vld [vmem:[%s3 + $0xc0] sm:$0xf]
    %v2948 = vld [vmem:[%s3 + $0xc4] sm:$0xf]
    %v2949 = vld [vmem:[%s3 + $0xc8] sm:$0xf]
    %v2950 = vld [vmem:[%s3 + $0xcc] sm:$0xf]
    %v2951 = vld [vmem:[%s3 + $0xd0] sm:$0xf]
    %v2952 = vld [vmem:[%s3 + $0xd4] sm:$0xf]
    %v2953 = vld [vmem:[%s3 + $0xd8] sm:$0xf]
    %v2954 = vld [vmem:[%s3 + $0xdc] sm:$0xf]
    %v2955 = vld [vmem:[%s3 + $0xe0] sm:$0xf]
    %v2956 = vld [vmem:[%s3 + $0xe4] sm:$0xf]
    %v2957 = vld [vmem:[%s3 + $0xe8] sm:$0xf]
    %v2958 = vld [vmem:[%s3 + $0xec] sm:$0xf]
    %v2959 = vld [vmem:[%s3 + $0xf0] sm:$0xf]
    %v2960 = vld [vmem:[%s3 + $0xf4] sm:$0xf]
    %v2961 = vld [vmem:[%s3 + $0xf8] sm:$0xf]
    %v2962 = vld [vmem:[%s3 + $0xfc] sm:$0xf]
    %v2963 = vld [vmem:[%s3 + $0x100] sm:$0xf]
    %v2964 = vld [vmem:[%s3 + $0x104] sm:$0xf]
    %v2965 = vld [vmem:[%s3 + $0x108] sm:$0xf]
    %v2966 = vld [vmem:[%s3 + $0x10c] sm:$0xf]
    %v2967 = vld [vmem:[%s3 + $0x110] sm:$0xf]
    %v2968 = vld [vmem:[%s3 + $0x114] sm:$0xf]
    %v2969 = vld [vmem:[%s3 + $0x118] sm:$0xf]
    %v2970 = vld [vmem:[%s3 + $0x11c] sm:$0xf]
    %v2971 = vld [vmem:[%s3 + $0x120] sm:$0xf]
    %v2972 = vld [vmem:[%s3 + $0x124] sm:$0xf]
    %v2973 = vld [vmem:[%s3 + $0x128] sm:$0xf]
    %v2974 = vld [vmem:[%s3 + $0x12c] sm:$0xf]
    %v2975 = vld [vmem:[%s3 + $0x130] sm:$0xf]
    %v2976 = vld [vmem:[%s3 + $0x134] sm:$0xf]
    %v2977 = vld [vmem:[%s3 + $0x138] sm:$0xf]
    %v2978 = vld [vmem:[%s3 + $0x13c] sm:$0xf]
    %v2979 = vld [vmem:[%s3 + $0x140] sm:$0xf]
    %v2980 = vld [vmem:[%s3 + $0x144] sm:$0xf]
    %v2981 = vld [vmem:[%s3 + $0x148] sm:$0xf]
    %v2982 = vld [vmem:[%s3 + $0x14c] sm:$0xf]
    %v2983 = vld [vmem:[%s3 + $0x150] sm:$0xf]
    %v2984 = vld [vmem:[%s3 + $0x154] sm:$0xf]
    %v2985 = vld [vmem:[%s3 + $0x158] sm:$0xf]
    %v2986 = vld [vmem:[%s3 + $0x15c] sm:$0xf]
    %v2987 = vld [vmem:[%s3 + $0x160] sm:$0xf]
    %v2988 = vld [vmem:[%s3 + $0x164] sm:$0xf]
    %v2989 = vld [vmem:[%s3 + $0x168] sm:$0xf]
    %v2990 = vld [vmem:[%s3 + $0x16c] sm:$0xf]
    %v2991 = vld [vmem:[%s3 + $0x170] sm:$0xf]
    %v2992 = vld [vmem:[%s3 + $0x174] sm:$0xf]
    %v2993 = vld [vmem:[%s3 + $0x178] sm:$0xf]
    %v2994 = vld [vmem:[%s3 + $0x17c] sm:$0xf]
    %v2995 = vld [vmem:[%s3 + $0x180] sm:$0xf]
    %v2996 = vld [vmem:[%s3 + $0x184] sm:$0xf]
    %v2997 = vld [vmem:[%s3 + $0x188] sm:$0xf]
    %v2998 = vld [vmem:[%s3 + $0x18c] sm:$0xf]
    %v2999 = vld [vmem:[%s3 + $0x190] sm:$0xf]
    %v3000 = vld [vmem:[%s3 + $0x194] sm:$0xf]
    %v3001 = vld [vmem:[%s3 + $0x198] sm:$0xf]
    %v3002 = vld [vmem:[%s3 + $0x19c] sm:$0xf]
    %v3003 = vld [vmem:[%s3 + $0x1a0] sm:$0xf]
    %v3004 = vld [vmem:[%s3 + $0x1a4] sm:$0xf]
    %v3005 = vld [vmem:[%s3 + $0x1a8] sm:$0xf]
    %v3006 = vld [vmem:[%s3 + $0x1ac] sm:$0xf]
    %v3007 = vld [vmem:[%s3 + $0x1b0] sm:$0xf]
    %v3008 = vld [vmem:[%s3 + $0x1b4] sm:$0xf]
    %v3009 = vld [vmem:[%s3 + $0x1b8] sm:$0xf]
    %v3010 = vld [vmem:[%s3 + $0x1bc] sm:$0xf]
    %v3011 = vld [vmem:[%s4] sm:$0x1]
    %v3013 = vlaneseq
    %v3014 = vshrl.u32 %v3013, 7
    %v3015 = vsub.s32 0, %v3014
    %v3016 = vrot.slane %v3011, %v3015
    %v3130 = vunpack.c.l.b16 %v2899
    %v3131 = vunpack.c.l.b16 %v2900
    %v3132 = vunpack.c.l.b16 %v2901
    %v3133 = vunpack.c.l.b16 %v2902
    %v3134 = vunpack.c.l.b16 %v2903
    %v3135 = vunpack.c.l.b16 %v2904
    %v3136 = vunpack.c.l.b16 %v2905
    %v3137 = vunpack.c.l.b16 %v2906
    %v3138 = vunpack.c.l.b16 %v2907
    %v3139 = vunpack.c.l.b16 %v2908
    %v3140 = vunpack.c.l.b16 %v2909
    %v3141 = vunpack.c.l.b16 %v2910
    %v3142 = vunpack.c.l.b16 %v2911
    %v3143 = vunpack.c.l.b16 %v2912
    %v3144 = vunpack.c.l.b16 %v2913
    %v3145 = vunpack.c.l.b16 %v2914
    %v3146 = vunpack.c.l.b16 %v2915
    %v3147 = vunpack.c.l.b16 %v2916
    %v3148 = vunpack.c.l.b16 %v2917
    %v3149 = vunpack.c.l.b16 %v2918
    %v3150 = vunpack.c.l.b16 %v2919
    %v3151 = vunpack.c.l.b16 %v2920
    %v3152 = vunpack.c.l.b16 %v2921
    %v3153 = vunpack.c.l.b16 %v2922
    %v3154 = vunpack.c.l.b16 %v2923
    %v3155 = vunpack.c.l.b16 %v2924
    %v3156 = vunpack.c.l.b16 %v2925
    %v3157 = vunpack.c.l.b16 %v2926
    %v3158 = vunpack.c.l.b16 %v2927
    %v3159 = vunpack.c.l.b16 %v2928
    %v3160 = vunpack.c.l.b16 %v2929
    %v3161 = vunpack.c.l.b16 %v2930
    %v3162 = vunpack.c.l.b16 %v2931
    %v3163 = vunpack.c.l.b16 %v2932
    %v3164 = vunpack.c.l.b16 %v2933
    %v3165 = vunpack.c.l.b16 %v2934
    %v3166 = vunpack.c.l.b16 %v2935
    %v3167 = vunpack.c.l.b16 %v2936
    %v3168 = vunpack.c.l.b16 %v2937
    %v3169 = vunpack.c.l.b16 %v2938
    %v3170 = vunpack.c.l.b16 %v2939
    %v3171 = vunpack.c.l.b16 %v2940
    %v3172 = vunpack.c.l.b16 %v2941
    %v3173 = vunpack.c.l.b16 %v2942
    %v3174 = vunpack.c.l.b16 %v2943
    %v3175 = vunpack.c.l.b16 %v2944
    %v3176 = vunpack.c.l.b16 %v2945
    %v3177 = vunpack.c.l.b16 %v2946
    %v3178 = vunpack.c.l.b16 %v2947
    %v3179 = vunpack.c.l.b16 %v2948
    %v3180 = vunpack.c.l.b16 %v2949
    %v3181 = vunpack.c.l.b16 %v2950
    %v3182 = vunpack.c.l.b16 %v2951
    %v3183 = vunpack.c.l.b16 %v2952
    %v3184 = vunpack.c.l.b16 %v2953
    %v3185 = vunpack.c.l.b16 %v2954
    %v3186 = vunpack.c.l.b16 %v2955
    %v3187 = vunpack.c.l.b16 %v2956
    %v3188 = vunpack.c.l.b16 %v2957
    %v3189 = vunpack.c.l.b16 %v2958
    %v3190 = vunpack.c.l.b16 %v2959
    %v3191 = vunpack.c.l.b16 %v2960
    %v3192 = vunpack.c.l.b16 %v2961
    %v3193 = vunpack.c.l.b16 %v2962
    %v3194 = vunpack.c.l.b16 %v2963
    %v3195 = vunpack.c.l.b16 %v2964
    %v3196 = vunpack.c.l.b16 %v2965
    %v3197 = vunpack.c.l.b16 %v2966
    %v3198 = vunpack.c.l.b16 %v2967
    %v3199 = vunpack.c.l.b16 %v2968
    %v3200 = vunpack.c.l.b16 %v2969
    %v3201 = vunpack.c.l.b16 %v2970
    %v3202 = vunpack.c.l.b16 %v2971
    %v3203 = vunpack.c.l.b16 %v2972
    %v3204 = vunpack.c.l.b16 %v2973
    %v3205 = vunpack.c.l.b16 %v2974
    %v3206 = vunpack.c.l.b16 %v2975
    %v3207 = vunpack.c.l.b16 %v2976
    %v3208 = vunpack.c.l.b16 %v2977
    %v3209 = vunpack.c.l.b16 %v2978
    %v3210 = vunpack.c.l.b16 %v2979
    %v3211 = vunpack.c.l.b16 %v2980
    %v3212 = vunpack.c.l.b16 %v2981
    %v3213 = vunpack.c.l.b16 %v2982
    %v3214 = vunpack.c.l.b16 %v2983
    %v3215 = vunpack.c.l.b16 %v2984
    %v3216 = vunpack.c.l.b16 %v2985
    %v3217 = vunpack.c.l.b16 %v2986
    %v3218 = vunpack.c.l.b16 %v2987
    %v3219 = vunpack.c.l.b16 %v2988
    %v3220 = vunpack.c.l.b16 %v2989
    %v3221 = vunpack.c.l.b16 %v2990
    %v3222 = vunpack.c.l.b16 %v2991
    %v3223 = vunpack.c.l.b16 %v2992
    %v3224 = vunpack.c.l.b16 %v2993
    %v3225 = vunpack.c.l.b16 %v2994
    %v3226 = vunpack.c.l.b16 %v2995
    %v3227 = vunpack.c.l.b16 %v2996
    %v3228 = vunpack.c.l.b16 %v2997
    %v3229 = vunpack.c.l.b16 %v2998
    %v3230 = vunpack.c.l.b16 %v2999
    %v3231 = vunpack.c.l.b16 %v3000
    %v3232 = vunpack.c.l.b16 %v3001
    %v3233 = vunpack.c.l.b16 %v3002
    %v3234 = vunpack.c.l.b16 %v3003
    %v3235 = vunpack.c.l.b16 %v3004
    %v3236 = vunpack.c.l.b16 %v3005
    %v3237 = vunpack.c.l.b16 %v3006
    %v3238 = vunpack.c.l.b16 %v3007
    %v3239 = vunpack.c.l.b16 %v3008
    %v3240 = vunpack.c.l.b16 %v3009
    %v3241 = vunpack.c.l.b16 %v3010
    %v3242 = vpack.c.b16 %v3131, %v3130
    %v3243 = vpack.c.b16 %v3133, %v3132
    %v3244 = vpack.c.b16 %v3135, %v3134
    %v3245 = vpack.c.b16 %v3137, %v3136
    %v3246 = vpack.c.b16 %v3139, %v3138
    %v3247 = vpack.c.b16 %v3141, %v3140
    %v3248 = vpack.c.b16 %v3143, %v3142
    %v3249 = vpack.c.b16 %v3145, %v3144
    %v3250 = vpack.c.b16 %v3147, %v3146
    %v3251 = vpack.c.b16 %v3149, %v3148
    %v3252 = vpack.c.b16 %v3151, %v3150
    %v3253 = vpack.c.b16 %v3153, %v3152
    %v3254 = vpack.c.b16 %v3155, %v3154
    %v3255 = vpack.c.b16 %v3157, %v3156
    %v3256 = vpack.c.b16 %v3159, %v3158
    %v3257 = vpack.c.b16 %v3161, %v3160
    %v3258 = vpack.c.b16 %v3163, %v3162
    %v3259 = vpack.c.b16 %v3165, %v3164
    %v3260 = vpack.c.b16 %v3167, %v3166
    %v3261 = vpack.c.b16 %v3169, %v3168
    %v3262 = vpack.c.b16 %v3171, %v3170
    %v3263 = vpack.c.b16 %v3173, %v3172
    %v3264 = vpack.c.b16 %v3175, %v3174
    %v3265 = vpack.c.b16 %v3177, %v3176
    %v3266 = vpack.c.b16 %v3179, %v3178
    %v3267 = vpack.c.b16 %v3181, %v3180
    %v3268 = vpack.c.b16 %v3183, %v3182
    %v3269 = vpack.c.b16 %v3185, %v3184
    %v3270 = vpack.c.b16 %v3187, %v3186
    %v3271 = vpack.c.b16 %v3189, %v3188
    %v3272 = vpack.c.b16 %v3191, %v3190
    %v3273 = vpack.c.b16 %v3193, %v3192
    %v3274 = vpack.c.b16 %v3195, %v3194
    %v3275 = vpack.c.b16 %v3197, %v3196
    %v3276 = vpack.c.b16 %v3199, %v3198
    %v3277 = vpack.c.b16 %v3201, %v3200
    %v3278 = vpack.c.b16 %v3203, %v3202
    %v3279 = vpack.c.b16 %v3205, %v3204
    %v3280 = vpack.c.b16 %v3207, %v3206
    %v3281 = vpack.c.b16 %v3209, %v3208
    %v3282 = vpack.c.b16 %v3211, %v3210
    %v3283 = vpack.c.b16 %v3213, %v3212
    %v3284 = vpack.c.b16 %v3215, %v3214
    %v3285 = vpack.c.b16 %v3217, %v3216
    %v3286 = vpack.c.b16 %v3219, %v3218
    %v3287 = vpack.c.b16 %v3221, %v3220
    %v3288 = vpack.c.b16 %v3223, %v3222
    %v3289 = vpack.c.b16 %v3225, %v3224
    %v3290 = vpack.c.b16 %v3227, %v3226
    %v3291 = vpack.c.b16 %v3229, %v3228
    %v3292 = vpack.c.b16 %v3231, %v3230
    %v3293 = vpack.c.b16 %v3233, %v3232
    %v3294 = vpack.c.b16 %v3235, %v3234
    %v3295 = vpack.c.b16 %v3237, %v3236
    %v3296 = vpack.c.b16 %v3239, %v3238
    %v3297 = vpack.c.b16 %v3241, %v3240
    %3354 = vmatprep.subr.bf16.mxu0 0
    %3355 = vmatpush1.bf16.msra.mxu0 %v3249
    %3356 = vmatprep.subr.bf16.mxu0 0
    %3357 = vmatpush1.bf16.msra.mxu0 %v3248
    %3358 = vmatprep.subr.bf16.mxu0 0
    %3359 = vmatpush1.bf16.msra.mxu0 %v3247
    %3360 = vmatprep.subr.bf16.mxu0 0
    %3361 = vmatpush1.bf16.msra.mxu0 %v3246
    %3362 = vmatprep.subr.bf16.mxu0 0
    %3363 = vmatpush1.bf16.msra.mxu0 %v3245
    %3364 = vmatprep.subr.bf16.mxu0 0
    %3365 = vmatpush1.bf16.msra.mxu0 %v3244
    %3366 = vmatprep.subr.bf16.mxu0 0
    %3367 = vmatpush1.bf16.msra.mxu0 %v3243
    %3368 = vmatprep.subr.bf16.mxu0 0
    %3369 = vmatpush1.bf16.msra.mxu0 %v3242
    %3370 = vmatprep.subr.bf16.mxu0 0
    %3371 = vmatpush2.bf16.msra.mxu0 %v3257
    %3372 = vmatprep.subr.bf16.mxu0 0
    %3373 = vmatpush2.bf16.msra.mxu0 %v3256
    %3374 = vmatprep.subr.bf16.mxu0 0
    %3375 = vmatpush2.bf16.msra.mxu0 %v3255
    %3376 = vmatprep.subr.bf16.mxu0 0
    %3377 = vmatpush2.bf16.msra.mxu0 %v3254
    %3378 = vmatprep.subr.bf16.mxu0 0
    %3379 = vmatpush2.bf16.msra.mxu0 %v3253
    %3380 = vmatprep.subr.bf16.mxu0 0
    %3381 = vmatpush2.bf16.msra.mxu0 %v3252
    %3382 = vmatprep.subr.bf16.mxu0 0
    %3383 = vmatpush2.bf16.msra.mxu0 %v3251
    %3384 = vmatprep.subr.bf16.mxu0 0
    %3385 = vmatpush2.bf16.msra.mxu0 %v3250
    %3386 = vmatprep.mubr.bf16.mxu0 %v2893
    %3387 = vmatmul.mubr.bf16.gmra.mxu0 %v2892
    %v3388 = vpop.f32.mrf.mxu0
    %v3389 = vadd.f32 %v3016, %v3388
    %v3390 = vpop.f32.mrf.mxu0
    %v3391 = vpop.f32.mrf.mxu0
    %v3392 = vpop.f32.mrf.mxu0
    %3393 = vdwg.mxu0
    %3394 = vmatprep.subr.bf16.mxu0 0
    %3395 = vmatpush1.bf16.msra.mxu0 %v3265
    %3396 = vmatprep.subr.bf16.mxu0 0
    %3397 = vmatpush1.bf16.msra.mxu0 %v3264
    %3398 = vmatprep.subr.bf16.mxu0 0
    %3399 = vmatpush1.bf16.msra.mxu0 %v3263
    %3400 = vmatprep.subr.bf16.mxu0 0
    %3401 = vmatpush1.bf16.msra.mxu0 %v3262
    %3402 = vmatprep.subr.bf16.mxu0 0
    %3403 = vmatpush1.bf16.msra.mxu0 %v3261
    %3404 = vmatprep.subr.bf16.mxu0 0
    %3405 = vmatpush1.bf16.msra.mxu0 %v3260
    %3406 = vmatprep.subr.bf16.mxu0 0
    %3407 = vmatpush1.bf16.msra.mxu0 %v3259
    %3408 = vmatprep.subr.bf16.mxu0 0
    %3409 = vmatpush1.bf16.msra.mxu0 %v3258
    %3410 = vmatprep.subr.bf16.mxu0 0
    %3411 = vmatpush2.bf16.msra.mxu0 %v3273
    %3412 = vmatprep.subr.bf16.mxu0 0
    %3413 = vmatpush2.bf16.msra.mxu0 %v3272
    %3414 = vmatprep.subr.bf16.mxu0 0
    %3415 = vmatpush2.bf16.msra.mxu0 %v3271
    %3416 = vmatprep.subr.bf16.mxu0 0
    %3417 = vmatpush2.bf16.msra.mxu0 %v3270
    %3418 = vmatprep.subr.bf16.mxu0 0
    %3419 = vmatpush2.bf16.msra.mxu0 %v3269
    %3420 = vmatprep.subr.bf16.mxu0 0
    %3421 = vmatpush2.bf16.msra.mxu0 %v3268
    %3422 = vmatprep.subr.bf16.mxu0 0
    %3423 = vmatpush2.bf16.msra.mxu0 %v3267
    %3424 = vmatprep.subr.bf16.mxu0 0
    %3425 = vmatpush2.bf16.msra.mxu0 %v3266
    %3426 = vmatprep.mubr.bf16.mxu0 %v2895
    %3427 = vmatmul.mubr.bf16.gmra.mxu0 %v2894
    %v3428 = vpop.f32.mrf.mxu0
    %v3429 = vadd.f32 %v3389, %v3428
    %v3430 = vpop.f32.mrf.mxu0
    %v3431 = vpop.f32.mrf.mxu0
    %v3432 = vpop.f32.mrf.mxu0
    %3433 = vdwg.mxu0
    %3434 = vmatprep.subr.bf16.mxu0 0
    %3435 = vmatpush1.bf16.msra.mxu0 %v3281
    %3436 = vmatprep.subr.bf16.mxu0 0
    %3437 = vmatpush1.bf16.msra.mxu0 %v3280
    %3438 = vmatprep.subr.bf16.mxu0 0
    %3439 = vmatpush1.bf16.msra.mxu0 %v3279
    %3440 = vmatprep.subr.bf16.mxu0 0
    %3441 = vmatpush1.bf16.msra.mxu0 %v3278
    %3442 = vmatprep.subr.bf16.mxu0 0
    %3443 = vmatpush1.bf16.msra.mxu0 %v3277
    %3444 = vmatprep.subr.bf16.mxu0 0
    %3445 = vmatpush1.bf16.msra.mxu0 %v3276
    %3446 = vmatprep.subr.bf16.mxu0 0
    %3447 = vmatpush1.bf16.msra.mxu0 %v3275
    %3448 = vmatprep.subr.bf16.mxu0 0
    %3449 = vmatpush1.bf16.msra.mxu0 %v3274
    %3450 = vmatprep.subr.bf16.mxu0 0
    %3451 = vmatpush2.bf16.msra.mxu0 %v3289
    %3452 = vmatprep.subr.bf16.mxu0 0
    %3453 = vmatpush2.bf16.msra.mxu0 %v3288
    %3454 = vmatprep.subr.bf16.mxu0 0
    %3455 = vmatpush2.bf16.msra.mxu0 %v3287
    %3456 = vmatprep.subr.bf16.mxu0 0
    %3457 = vmatpush2.bf16.msra.mxu0 %v3286
    %3458 = vmatprep.subr.bf16.mxu0 0
    %3459 = vmatpush2.bf16.msra.mxu0 %v3285
    %3460 = vmatprep.subr.bf16.mxu0 0
    %3461 = vmatpush2.bf16.msra.mxu0 %v3284
    %3462 = vmatprep.subr.bf16.mxu0 0
    %3463 = vmatpush2.bf16.msra.mxu0 %v3283
    %3464 = vmatprep.subr.bf16.mxu0 0
    %3465 = vmatpush2.bf16.msra.mxu0 %v3282
    %3466 = vmatprep.mubr.bf16.mxu0 %v2897
    %3467 = vmatmul.mubr.bf16.gmra.mxu0 %v2896
    %v3468 = vpop.f32.mrf.mxu0
    %v3469 = vadd.f32 %v3429, %v3468
    %v3470 = vpop.f32.mrf.mxu0
    %v3471 = vpop.f32.mrf.mxu0
    %v3472 = vpop.f32.mrf.mxu0
    %3473 = vdwg.mxu0
    %3474 = vmatprep.subr.bf16.mxu0 0
    %3475 = vmatpush1.bf16.msra.mxu0 %v3297
    %3476 = vmatprep.subr.bf16.mxu0 0
    %3477 = vmatpush1.bf16.msra.mxu0 %v3296
    %3478 = vmatprep.subr.bf16.mxu0 0
    %3479 = vmatpush1.bf16.msra.mxu0 %v3295
    %3480 = vmatprep.subr.bf16.mxu0 0
    %3481 = vmatpush1.bf16.msra.mxu0 %v3294
    %3482 = vmatprep.subr.bf16.mxu0 0
    %3483 = vmatpush1.bf16.msra.mxu0 %v3293
    %3484 = vmatprep.subr.bf16.mxu0 0
    %3485 = vmatpush1.bf16.msra.mxu0 %v3292
    %3486 = vmatprep.subr.bf16.mxu0 0
    %3487 = vmatpush1.bf16.msra.mxu0 %v3291
    %3488 = vmatprep.subr.bf16.mxu0 0
    %3489 = vmatpush1.bf16.msra.mxu0 %v3290
    %3490 = vmatprep.subr.bf16.mxu0 0
    %3491 = vmatpush2.bf16.msra.mxu0 0
    %3492 = vmatprep.subr.bf16.mxu0 0
    %3493 = vmatpush2.bf16.msra.mxu0 0
    %3494 = vmatprep.subr.bf16.mxu0 0
    %3495 = vmatpush2.bf16.msra.mxu0 0
    %3496 = vmatprep.subr.bf16.mxu0 0
    %3497 = vmatpush2.bf16.msra.mxu0 0
    %3498 = vmatprep.subr.bf16.mxu0 0
    %3499 = vmatpush2.bf16.msra.mxu0 0
    %3500 = vmatprep.subr.bf16.mxu0 0
    %3501 = vmatpush2.bf16.msra.mxu0 0
    %3502 = vmatprep.subr.bf16.mxu0 0
    %3503 = vmatpush2.bf16.msra.mxu0 0
    %3504 = vmatprep.subr.bf16.mxu0 0
    %3505 = vmatpush2.bf16.msra.mxu0 0
    %3506 = vmatprep.mubr.bf16.mxu0 0
    %3507 = vmatmul.mubr.bf16.gmra.mxu0 %v2898
    %v3508 = vpop.f32.mrf.mxu0
    %v3509 = vadd.f32 %v3469, %v3508
    %v3510 = vpop.f32.mrf.mxu0
    %v3511 = vpop.f32.mrf.mxu0
    %v3512 = vpop.f32.mrf.mxu0
    %3513 = vdwg.mxu0
    %3514 = vmax.xlane.f32.xlu0 %v3509
    %v3515 = vpop.xlane.xlu0 %3514
    %v3516 = vsub.f32 %v3509, %v3515
    %v3517 = vmul.f32 %v3516, 1.442695
    %v3518 = vpow.pop %v3517
    %3519 = vadd.xlane.f32.xlu0 %v3518
    %v3520 = vpop.xlane.xlu0 %3519
    %v3521 = vrcp.pop %v3520
    %v3522 = vmul.f32 %v3518, %v3521
    %3523 = vst [vmem:[#allocation2] sm:$0xff] %v3522
    // Predicated region
    $region22: #{classifier_small_forward.1} parent=1 // pred_check
      _
    $region23: #{classifier_small_forward.1} parent=1 // pred_check_branch
      %3525 = sbr.rel (0) target = $region25
    $region24: #{classifier_small_forward.1} parent=1 // pred_region
      %s3527 = ssub.s32 128, 128
      %3528 = vsyncadd [#allocation3], %s3527
      %s3530 = sshll.u32 [#allocation2], 4
      %s3531 = int_to_ptr.vmem [resolvable:$true] %s3530
      %3533 = dma.vmem_to_hbm [thread:$0]  %s3531, 128, %s5, [#allocation3]
    $region25: #{classifier_small_forward.1} parent=1 // pred_fallthru
      _
    // Predicated region
    $region26: #{classifier_small_forward.1} parent=1 // pred_check
      _
    $region27: #{classifier_small_forward.1} parent=1 // pred_check_branch
      %3535 = sbr.rel (0) target = $region29
    $region28: #{classifier_small_forward.1} parent=1 // pred_region
      %3536 = dma.done [#allocation3], 128
    $region29: #{classifier_small_forward.1} parent=1 // pred_fallthru
      _
    %3537 = vsyncpa [#allocation3], 1

</llo_original>
